<compile_context>
chip_gen: v7x
topology: tpu7x:2x2x1
jax: 0.10.0
libtpu: 0.0.40
codegen_flags: <defaults>
</compile_context>

<pallas_src>
import functools

import jax
import jax.numpy as jnp
from jax import lax
from jax.experimental import pallas as pl
from jax.experimental.pallas import tpu as pltpu

EPS = 1e-5
VMEM_LIMIT = 32 * 1024 * 1024


def _pad128(n):
    return ((n + 127) // 128) * 128


# --------------------------------------------------------------------------
# Pallas kernels
# --------------------------------------------------------------------------
def _conv_kernel(x_ref, w_ref, s_ref, b_ref, o_ref, *, K, stride, cin_p, relu):
    # x_ref: (1, Lq, stride*cin_p) phase-packed, zero-padded activation
    # w_ref: (K, cin_p, cout_p) tap-major weights; s_ref/b_ref: (1, cout_p)
    Lout = o_ref.shape[1]
    cout_p = o_ref.shape[2]
    acc = jnp.zeros((Lout, cout_p), jnp.float32)
    for k in range(K):                               # fused im2col: per-tap matmul
        q, r = divmod(k, stride)
        xk = x_ref[0, q:q + Lout, r * cin_p:(r + 1) * cin_p]   # (Lout, cin_p)
        acc = acc + jnp.dot(xk, w_ref[k], preferred_element_type=jnp.float32)
    y = acc * s_ref[...] + b_ref[...]                # folded BatchNorm (+ conv bias)
    if relu:
        y = jnp.maximum(y, 0.0)
    o_ref[0] = y.astype(o_ref.dtype)


def _attn_kernel(*refs, ker, has_res):
    if has_res:
        (x_ref, ln_g_ref, ln_b_ref, dw_w_ref, dw_b_ref,
         w1_ref, b1_ref, w2_ref, b2_ref, res_ref, o_ref, pool_ref) = refs
    else:
        (x_ref, ln_g_ref, ln_b_ref, dw_w_ref, dw_b_ref,
         w1_ref, b1_ref, w2_ref, b2_ref, o_ref, pool_ref) = refs
        res_ref = None

    x = x_ref[0].astype(jnp.float32)                 # (L, C)
    L, C = x.shape

    # LayerNorm over the length axis (PyTorch LayerNorm(norm_size=L) on (B,C,L)).
    mean = jnp.mean(x, axis=0, keepdims=True)        # (1, C)
    var = jnp.mean(jnp.square(x - mean), axis=0, keepdims=True)
    xn = (x - mean) * lax.rsqrt(var + EPS)
    xn = xn * ln_g_ref[...] + ln_b_ref[...]          # per-position affine, lane dense

    # Spatial attention: zero-padded depthwise conv over length as K shifted
    # reads + VPU multiply-accumulate (no (L,L) shift matrices / MXU use).
    pad = (ker - 1) // 2
    if pad > 0:
        z = jnp.zeros((pad, C), jnp.float32)
        xpad = jnp.concatenate([z, xn, z], axis=0)   # (L + 2*pad, C)
    else:
        xpad = xn
    s = jnp.zeros((L, C), jnp.float32)
    for k in range(ker):
        s = s + xpad[k:k + L, :] * dw_w_ref[k, :]
    sw = jax.nn.sigmoid(s + dw_b_ref[...])
    xs = xn * sw

    # Channel attention (squeeze & excite).
    pooled = jnp.mean(xs, axis=0, keepdims=True)     # (1, C) adaptive avg pool
    h = jnp.dot(pooled, w1_ref[...], preferred_element_type=jnp.float32) + b1_ref[...]
    h = jnp.maximum(h, 0.0)
    cw = jax.nn.sigmoid(
        jnp.dot(h, w2_ref[...], preferred_element_type=jnp.float32) + b2_ref[...])
    out = xs * cw

    # Fused residual add (Basic/Bottleneck block epilogue).
    if has_res:
        out = out + res_ref[0].astype(jnp.float32)

    o_ref[0] = out.astype(o_ref.dtype)
    # Fused global-average-pool (consumed by the classifier head).
    pool_ref[0] = jnp.mean(out, axis=0, keepdims=True).astype(pool_ref.dtype)


def _head_kernel(p_ref, w1_ref, b1_ref, s1_ref, t1_ref, w2_ref, b2_ref, o_ref):
    pooled = p_ref[...].astype(jnp.float32)          # (B, C4p) already pooled
    h = jnp.dot(pooled, w1_ref[...], preferred_element_type=jnp.float32) + b1_ref[...]
    h = jnp.maximum(h * s1_ref[...] + t1_ref[...], 0.0)      # BN1 (eval) + ReLU
    out = jnp.dot(h, w2_ref[...], preferred_element_type=jnp.float32) + b2_ref[...]
    o_ref[...] = out.astype(o_ref.dtype)


# --------------------------------------------------------------------------
# Wrappers
# --------------------------------------------------------------------------
def conv1d_bn_act(x, p, *, stride, padding, relu):
    """x: (B, L, Cin_pad).  p['w']: (K, Cin_pad, Cout_pad).  Returns (B, Lout, Cout_pad)."""
    B, L, cin_p = x.shape
    K, _, cout_p = p["w"].shape
    Lout = (L + 2 * padding - K) // stride + 1
    qmax = (K - 1) // stride
    Lq = Lout + qmax
    total = Lq * stride

    # zero-pad (conv padding + tail so that length == Lq*stride), then phase-pack
    xp = jnp.pad(x, ((0, 0), (padding, 0), (0, 0)))
    cur = L + padding
    if total > cur:
        xp = jnp.pad(xp, ((0, 0), (0, total - cur), (0, 0)))
    elif total < cur:
        xp = xp[:, :total, :]
    xph = xp.reshape(B, Lq, stride * cin_p)

    kernel = functools.partial(_conv_kernel, K=K, stride=stride, cin_p=cin_p, relu=relu)
    return pl.pallas_call(
        kernel,
        out_shape=jax.ShapeDtypeStruct((B, Lout, cout_p), x.dtype),
        grid=(B,),
        in_specs=[
            pl.BlockSpec((1, Lq, stride * cin_p), lambda b: (b, 0, 0)),
            pl.BlockSpec((K, cin_p, cout_p), lambda b: (0, 0, 0)),
            pl.BlockSpec((1, cout_p), lambda b: (0, 0)),
            pl.BlockSpec((1, cout_p), lambda b: (0, 0)),
        ],
        out_specs=pl.BlockSpec((1, Lout, cout_p), lambda b: (b, 0, 0)),
        compiler_params=pltpu.CompilerParams(
            dimension_semantics=("parallel",), vmem_limit_bytes=VMEM_LIMIT),
    )(xph, p["w"], p["scale"], p["shift"])


def attention_block(x, p, res=None):
    """Returns (out, pooled) where pooled = mean over L of out, shape (B, 1, Cp)."""
    B, L, Cp = x.shape
    ker = p["ker"]
    crp = p["w1"].shape[1]
    has_res = res is not None

    in_specs = [
        pl.BlockSpec((1, L, Cp), lambda b: (b, 0, 0)),
        pl.BlockSpec((L, Cp), lambda b: (0, 0)),
        pl.BlockSpec((L, Cp), lambda b: (0, 0)),
        pl.BlockSpec((ker, Cp), lambda b: (0, 0)),
        pl.BlockSpec((1, Cp), lambda b: (0, 0)),
        pl.BlockSpec((Cp, crp), lambda b: (0, 0)),
        pl.BlockSpec((1, crp), lambda b: (0, 0)),
        pl.BlockSpec((crp, Cp), lambda b: (0, 0)),
        pl.BlockSpec((1, Cp), lambda b: (0, 0)),
    ]
    args = [x, p["ln_g"], p["ln_b"], p["dw_w"], p["dw_b"],
            p["w1"], p["b1"], p["w2"], p["b2"]]
    if has_res:
        in_specs.append(pl.BlockSpec((1, L, Cp), lambda b: (b, 0, 0)))
        args.append(res)

    out, pooled = pl.pallas_call(
        functools.partial(_attn_kernel, ker=ker, has_res=has_res),
        out_shape=(jax.ShapeDtypeStruct((B, L, Cp), x.dtype),
                   jax.ShapeDtypeStruct((B, 1, Cp), x.dtype)),
        grid=(B,),
        in_specs=in_specs,
        out_specs=(pl.BlockSpec((1, L, Cp), lambda b: (b, 0, 0)),
                   pl.BlockSpec((1, 1, Cp), lambda b: (b, 0, 0))),
        compiler_params=pltpu.CompilerParams(
            dimension_semantics=("parallel",), vmem_limit_bytes=VMEM_LIMIT),
    )(*args)
    return out, pooled


def basic_block(x, p):
    pad = (p["ck"] - 1) // 2
    idn = conv1d_bn_act(x, p["down"], stride=p["stride"], padding=0, relu=False)
    out = conv1d_bn_act(x, p["c1"], stride=1, padding=pad, relu=True)
    out = conv1d_bn_act(out, p["c2"], stride=p["stride"], padding=pad, relu=True)
    return attention_block(out, p["attn"], res=idn)       # residual fused in-kernel


def bottleneck_block(x, p):
    pad = (p["ck"] - 1) // 2
    idn = conv1d_bn_act(x, p["down"], stride=p["stride"], padding=0, relu=False)
    out = conv1d_bn_act(x, p["c1"], stride=1, padding=0, relu=True)
    out = conv1d_bn_act(out, p["c2"], stride=p["stride"], padding=pad, relu=True)
    out = conv1d_bn_act(out, p["c3"], stride=1, padding=0, relu=True)
    return attention_block(out, p["attn"], res=idn)


def forward(x_ncl, P):
    x = jnp.transpose(x_ncl, (0, 2, 1))                    # NCL -> NLC
    B, L, cin = x.shape
    x = jnp.pad(x, ((0, 0), (0, 0), (0, _pad128(cin) - cin)))   # lane-pad channels
    x = conv1d_bn_act(x, P["conv1"], stride=3, padding=4, relu=False)
    x, _ = attention_block(x, P["attn1"], res=None)
    x, _ = basic_block(x, P["layer1"])
    x, _ = basic_block(x, P["layer3"])
    _, pooled = bottleneck_block(x, P["layer4"])           # fused GAP of (out + idn)
    pooled = pooled.reshape(B, pooled.shape[-1])           # (B, 384)
    h = P["head"]
    return pl.pallas_call(
        _head_kernel,
        out_shape=jax.ShapeDtypeStruct((B, 2), x.dtype),
    )(pooled, h["w1"], h["b1"], h["s1"], h["t1"], h["w2"], h["b2"])


# --------------------------------------------------------------------------
# Deterministic synthetic parameters (channel-padded at init time)
# --------------------------------------------------------------------------
class _Rng:
    def __init__(self, seed):
        self.key = jax.random.PRNGKey(seed)

    def normal(self, shape, scale=0.1):
        self.key, sub = jax.random.split(self.key)
        return scale * jax.random.normal(sub, shape, jnp.float32)


def init_params(cin, L0):
    rng = _Rng(1234)

    def conv(ci, co, k, *, bias, bn):
        cip, cop = _pad128(ci), _pad128(co)
        w = rng.normal((co, ci, k), 0.2)
        b = rng.normal((co,), 0.1) if bias else jnp.zeros((co,), jnp.float32)
        if bn:  # fold eval-mode BatchNorm into per-channel scale/shift
            gamma = 1.0 + rng.normal((co,), 0.1)
            beta = rng.normal((co,), 0.1)
            rmean = rng.normal((co,), 0.1)
            rvar = 1.0 + jnp.abs(rng.normal((co,), 0.1))
            scale = gamma / jnp.sqrt(rvar + EPS)
            shift = (b - rmean) * scale + beta
        else:
            scale = jnp.ones((co,), jnp.float32)
            shift = b
        wt = jnp.transpose(w, (2, 1, 0))                   # (K, Cin, Cout)
        wt = jnp.pad(wt, ((0, 0), (0, cip - ci), (0, cop - co)))
        return dict(
            w=wt,
            scale=jnp.pad(scale, (0, cop - co), constant_values=1.0).reshape(1, cop),
            shift=jnp.pad(shift, (0, cop - co)).reshape(1, cop))

    def attn(C, L, ker, r):
        Cp = _pad128(C)
        Cr = max(C // r, 1)
        Crp = _pad128(Cr)
        ln_g = (1.0 + rng.normal((L,), 0.1)).reshape(L, 1)
        ln_b = rng.normal((L,), 0.1).reshape(L, 1)
        return dict(
            ln_g=jnp.broadcast_to(ln_g, (L, Cp)),          # lane-dense LN affine
            ln_b=jnp.broadcast_to(ln_b, (L, Cp)),
            dw_w=jnp.pad(rng.normal((ker, C), 0.2), ((0, 0), (0, Cp - C))),
            dw_b=jnp.pad(rng.normal((1, C), 0.1), ((0, 0), (0, Cp - C))),
            w1=jnp.pad(rng.normal((C, Cr), 0.2), ((0, Cp - C), (0, Crp - Cr))),
            b1=jnp.pad(rng.normal((1, Cr), 0.1), ((0, 0), (0, Crp - Cr))),
            w2=jnp.pad(rng.normal((Cr, C), 0.2), ((0, Crp - Cr), (0, Cp - C))),
            b2=jnp.pad(rng.normal((1, C), 0.1), ((0, 0), (0, Cp - C))),
            ker=ker)

    L1 = (L0 - 1) // 3 + 1
    L2 = (L1 - 1) // 2 + 1
    L3 = (L2 - 1) // 2 + 1
    L4 = (L3 - 1) // 2 + 1

    P = {}
    P["conv1"] = conv(cin, 32, 9, bias=True, bn=False)
    P["attn1"] = attn(32, L1, 9, 4)
    P["layer1"] = dict(
        c1=conv(32, 64, 5, bias=False, bn=True),
        c2=conv(64, 64, 5, bias=False, bn=True),
        attn=attn(64, L2, 9, 16),
        down=conv(32, 64, 1, bias=True, bn=True),
        ck=5, stride=2)
    P["layer3"] = dict(
        c1=conv(64, 160, 3, bias=False, bn=True),
        c2=conv(160, 160, 3, bias=False, bn=True),
        attn=attn(160, L3, 7, 16),
        down=conv(64, 160, 1, bias=True, bn=True),
        ck=3, stride=2)
    plains = 304 // 4
    P["layer4"] = dict(
        c1=conv(160, plains, 1, bias=False, bn=True),
        c2=conv(plains, plains, 5, bias=False, bn=True),
        c3=conv(plains, 304, 1, bias=False, bn=True),
        attn=attn(304, L4, 7, 16),
        down=conv(160, 304, 1, bias=True, bn=True),
        ck=5, stride=2)

    c4p = _pad128(304)
    gamma = 1.0 + rng.normal((128,), 0.1)
    beta = rng.normal((128,), 0.1)
    rmean = rng.normal((128,), 0.1)
    rvar = 1.0 + jnp.abs(rng.normal((128,), 0.1))
    s1 = gamma / jnp.sqrt(rvar + EPS)
    t1 = beta - rmean * s1
    P["head"] = dict(
        w1=jnp.pad(rng.normal((304, 128), 0.1), ((0, c4p - 304), (0, 0))),
        b1=rng.normal((1, 128), 0.1),
        s1=s1.reshape(1, 128),
        t1=t1.reshape(1, 128),
        w2=rng.normal((128, 2), 0.1),
        b2=rng.normal((1, 2), 0.1))
    return P


# --------------------------------------------------------------------------
if __name__ == "__main__":
    B, CIN, L0 = 2, 4, 97          # small shapes; sequence length 97 (stand-in for 4001)
    x = jax.random.normal(jax.random.PRNGKey(0), (B, CIN, L0), jnp.float32)
    params = init_params(CIN, L0)
    out = forward(x, params)
    out = jax.block_until_ready(out)
    assert out.shape == (B, 2) and out.dtype == jnp.float32
    print("KERNEL_OK")
</pallas_src>

<mosaic_0001>
module attributes {stable_mosaic.version = 11 : i64} {
  func.func @_conv_kernel(%arg0: i32, %arg1: memref<1x35x384xf32, #tpu.memory_space<vmem>>, %arg2: memref<9x128x128xf32, #tpu.memory_space<vmem>>, %arg3: memref<1x128xf32, #tpu.memory_space<vmem>>, %arg4: memref<1x128xf32, #tpu.memory_space<vmem>>, %arg5: memref<1x33x128xf32, #tpu.memory_space<vmem>>) attributes {dimension_semantics = [#tpu.dimension_semantics<parallel>], iteration_bounds = array<i64: 2>, scalar_prefetch = 0 : i64, scratch_operands = 0 : i64, tpu.core_type = #tpu.core_type<tc>, window_params = [{transform_indices = @transform_0, window_bounds = array<i64: 1, 35, 384>}, {pipeline_mode = #tpu.pipeline_mode<synchronous>, transform_indices = @transform_1, window_bounds = array<i64: 9, 128, 128>}, {pipeline_mode = #tpu.pipeline_mode<synchronous>, transform_indices = @transform_2, window_bounds = array<i64: 1, 128>}, {pipeline_mode = #tpu.pipeline_mode<synchronous>, transform_indices = @transform_3, window_bounds = array<i64: 1, 128>}, {transform_indices = @transform_4, window_bounds = array<i64: 1, 33, 128>}]} {
    %cst = arith.constant 0.000000e+00 : f32
    %0 = vector.broadcast %cst : f32 to vector<33x128xf32>
    %c0 = arith.constant 0 : index
    %c0_0 = arith.constant 0 : index
    %c0_1 = arith.constant 0 : index
    %1 = vector.load %arg1[%c0, %c0_0, %c0_1] : memref<1x35x384xf32, #tpu.memory_space<vmem>>, vector<1x33x128xf32>
    %2 = vector.shape_cast %1 : vector<1x33x128xf32> to vector<33x128xf32>
    %c0_2 = arith.constant 0 : index
    %c0_3 = arith.constant 0 : index
    %c0_4 = arith.constant 0 : index
    %3 = vector.load %arg2[%c0_2, %c0_3, %c0_4] : memref<9x128x128xf32, #tpu.memory_space<vmem>>, vector<1x128x128xf32>
    %4 = vector.shape_cast %3 : vector<1x128x128xf32> to vector<128x128xf32>
    %cst_5 = arith.constant dense<0.000000e+00> : vector<33x128xf32>
    %5 = tpu.matmul %2, %4, %cst_5 {dimension_numbers = #tpu.dot_dimension_numbers<[1], [0], [0], [1], [0, 0, 1, 1], [], []>} : vector<33x128xf32>, vector<128x128xf32>, vector<33x128xf32> -> vector<33x128xf32>
    %6 = arith.addf %0, %5 : vector<33x128xf32>
    %c0_6 = arith.constant 0 : index
    %c0_7 = arith.constant 0 : index
    %c128 = arith.constant 128 : index
    %7 = vector.load %arg1[%c0_6, %c0_7, %c128] : memref<1x35x384xf32, #tpu.memory_space<vmem>>, vector<1x33x128xf32>
    %8 = vector.shape_cast %7 : vector<1x33x128xf32> to vector<33x128xf32>
    %c1 = arith.constant 1 : index
    %c0_8 = arith.constant 0 : index
    %c0_9 = arith.constant 0 : index
    %9 = vector.load %arg2[%c1, %c0_8, %c0_9] : memref<9x128x128xf32, #tpu.memory_space<vmem>>, vector<1x128x128xf32>
    %10 = vector.shape_cast %9 : vector<1x128x128xf32> to vector<128x128xf32>
    %cst_10 = arith.constant dense<0.000000e+00> : vector<33x128xf32>
    %11 = tpu.matmul %8, %10, %cst_10 {dimension_numbers = #tpu.dot_dimension_numbers<[1], [0], [0], [1], [0, 0, 1, 1], [], []>} : vector<33x128xf32>, vector<128x128xf32>, vector<33x128xf32> -> vector<33x128xf32>
    %12 = arith.addf %6, %11 : vector<33x128xf32>
    %c0_11 = arith.constant 0 : index
    %c0_12 = arith.constant 0 : index
    %c256 = arith.constant 256 : index
    %13 = vector.load %arg1[%c0_11, %c0_12, %c256] : memref<1x35x384xf32, #tpu.memory_space<vmem>>, vector<1x33x128xf32>
    %14 = vector.shape_cast %13 : vector<1x33x128xf32> to vector<33x128xf32>
    %c2 = arith.constant 2 : index
    %c0_13 = arith.constant 0 : index
    %c0_14 = arith.constant 0 : index
    %15 = vector.load %arg2[%c2, %c0_13, %c0_14] : memref<9x128x128xf32, #tpu.memory_space<vmem>>, vector<1x128x128xf32>
    %16 = vector.shape_cast %15 : vector<1x128x128xf32> to vector<128x128xf32>
    %cst_15 = arith.constant dense<0.000000e+00> : vector<33x128xf32>
    %17 = tpu.matmul %14, %16, %cst_15 {dimension_numbers = #tpu.dot_dimension_numbers<[1], [0], [0], [1], [0, 0, 1, 1], [], []>} : vector<33x128xf32>, vector<128x128xf32>, vector<33x128xf32> -> vector<33x128xf32>
    %18 = arith.addf %12, %17 : vector<33x128xf32>
    %c0_16 = arith.constant 0 : index
    %c1_17 = arith.constant 1 : index
    %c0_18 = arith.constant 0 : index
    %19 = vector.load %arg1[%c0_16, %c1_17, %c0_18] : memref<1x35x384xf32, #tpu.memory_space<vmem>>, vector<1x33x128xf32>
    %20 = vector.shape_cast %19 : vector<1x33x128xf32> to vector<33x128xf32>
    %c3 = arith.constant 3 : index
    %c0_19 = arith.constant 0 : index
    %c0_20 = arith.constant 0 : index
    %21 = vector.load %arg2[%c3, %c0_19, %c0_20] : memref<9x128x128xf32, #tpu.memory_space<vmem>>, vector<1x128x128xf32>
    %22 = vector.shape_cast %21 : vector<1x128x128xf32> to vector<128x128xf32>
    %cst_21 = arith.constant dense<0.000000e+00> : vector<33x128xf32>
    %23 = tpu.matmul %20, %22, %cst_21 {dimension_numbers = #tpu.dot_dimension_numbers<[1], [0], [0], [1], [0, 0, 1, 1], [], []>} : vector<33x128xf32>, vector<128x128xf32>, vector<33x128xf32> -> vector<33x128xf32>
    %24 = arith.addf %18, %23 : vector<33x128xf32>
    %c0_22 = arith.constant 0 : index
    %c1_23 = arith.constant 1 : index
    %c128_24 = arith.constant 128 : index
    %25 = vector.load %arg1[%c0_22, %c1_23, %c128_24] : memref<1x35x384xf32, #tpu.memory_space<vmem>>, vector<1x33x128xf32>
    %26 = vector.shape_cast %25 : vector<1x33x128xf32> to vector<33x128xf32>
    %c4 = arith.constant 4 : index
    %c0_25 = arith.constant 0 : index
    %c0_26 = arith.constant 0 : index
    %27 = vector.load %arg2[%c4, %c0_25, %c0_26] : memref<9x128x128xf32, #tpu.memory_space<vmem>>, vector<1x128x128xf32>
    %28 = vector.shape_cast %27 : vector<1x128x128xf32> to vector<128x128xf32>
    %cst_27 = arith.constant dense<0.000000e+00> : vector<33x128xf32>
    %29 = tpu.matmul %26, %28, %cst_27 {dimension_numbers = #tpu.dot_dimension_numbers<[1], [0], [0], [1], [0, 0, 1, 1], [], []>} : vector<33x128xf32>, vector<128x128xf32>, vector<33x128xf32> -> vector<33x128xf32>
    %30 = arith.addf %24, %29 : vector<33x128xf32>
    %c0_28 = arith.constant 0 : index
    %c1_29 = arith.constant 1 : index
    %c256_30 = arith.constant 256 : index
    %31 = vector.load %arg1[%c0_28, %c1_29, %c256_30] : memref<1x35x384xf32, #tpu.memory_space<vmem>>, vector<1x33x128xf32>
    %32 = vector.shape_cast %31 : vector<1x33x128xf32> to vector<33x128xf32>
    %c5 = arith.constant 5 : index
    %c0_31 = arith.constant 0 : index
    %c0_32 = arith.constant 0 : index
    %33 = vector.load %arg2[%c5, %c0_31, %c0_32] : memref<9x128x128xf32, #tpu.memory_space<vmem>>, vector<1x128x128xf32>
    %34 = vector.shape_cast %33 : vector<1x128x128xf32> to vector<128x128xf32>
    %cst_33 = arith.constant dense<0.000000e+00> : vector<33x128xf32>
    %35 = tpu.matmul %32, %34, %cst_33 {dimension_numbers = #tpu.dot_dimension_numbers<[1], [0], [0], [1], [0, 0, 1, 1], [], []>} : vector<33x128xf32>, vector<128x128xf32>, vector<33x128xf32> -> vector<33x128xf32>
    %36 = arith.addf %30, %35 : vector<33x128xf32>
    %c0_34 = arith.constant 0 : index
    %c2_35 = arith.constant 2 : index
    %c0_36 = arith.constant 0 : index
    %37 = vector.load %arg1[%c0_34, %c2_35, %c0_36] : memref<1x35x384xf32, #tpu.memory_space<vmem>>, vector<1x33x128xf32>
    %38 = vector.shape_cast %37 : vector<1x33x128xf32> to vector<33x128xf32>
    %c6 = arith.constant 6 : index
    %c0_37 = arith.constant 0 : index
    %c0_38 = arith.constant 0 : index
    %39 = vector.load %arg2[%c6, %c0_37, %c0_38] : memref<9x128x128xf32, #tpu.memory_space<vmem>>, vector<1x128x128xf32>
    %40 = vector.shape_cast %39 : vector<1x128x128xf32> to vector<128x128xf32>
    %cst_39 = arith.constant dense<0.000000e+00> : vector<33x128xf32>
    %41 = tpu.matmul %38, %40, %cst_39 {dimension_numbers = #tpu.dot_dimension_numbers<[1], [0], [0], [1], [0, 0, 1, 1], [], []>} : vector<33x128xf32>, vector<128x128xf32>, vector<33x128xf32> -> vector<33x128xf32>
    %42 = arith.addf %36, %41 : vector<33x128xf32>
    %c0_40 = arith.constant 0 : index
    %c2_41 = arith.constant 2 : index
    %c128_42 = arith.constant 128 : index
    %43 = vector.load %arg1[%c0_40, %c2_41, %c128_42] : memref<1x35x384xf32, #tpu.memory_space<vmem>>, vector<1x33x128xf32>
    %44 = vector.shape_cast %43 : vector<1x33x128xf32> to vector<33x128xf32>
    %c7 = arith.constant 7 : index
    %c0_43 = arith.constant 0 : index
    %c0_44 = arith.constant 0 : index
    %45 = vector.load %arg2[%c7, %c0_43, %c0_44] : memref<9x128x128xf32, #tpu.memory_space<vmem>>, vector<1x128x128xf32>
    %46 = vector.shape_cast %45 : vector<1x128x128xf32> to vector<128x128xf32>
    %cst_45 = arith.constant dense<0.000000e+00> : vector<33x128xf32>
    %47 = tpu.matmul %44, %46, %cst_45 {dimension_numbers = #tpu.dot_dimension_numbers<[1], [0], [0], [1], [0, 0, 1, 1], [], []>} : vector<33x128xf32>, vector<128x128xf32>, vector<33x128xf32> -> vector<33x128xf32>
    %48 = arith.addf %42, %47 : vector<33x128xf32>
    %c0_46 = arith.constant 0 : index
    %c2_47 = arith.constant 2 : index
    %c256_48 = arith.constant 256 : index
    %49 = vector.load %arg1[%c0_46, %c2_47, %c256_48] : memref<1x35x384xf32, #tpu.memory_space<vmem>>, vector<1x33x128xf32>
    %50 = vector.shape_cast %49 : vector<1x33x128xf32> to vector<33x128xf32>
    %c8 = arith.constant 8 : index
    %c0_49 = arith.constant 0 : index
    %c0_50 = arith.constant 0 : index
    %51 = vector.load %arg2[%c8, %c0_49, %c0_50] : memref<9x128x128xf32, #tpu.memory_space<vmem>>, vector<1x128x128xf32>
    %52 = vector.shape_cast %51 : vector<1x128x128xf32> to vector<128x128xf32>
    %cst_51 = arith.constant dense<0.000000e+00> : vector<33x128xf32>
    %53 = tpu.matmul %50, %52, %cst_51 {dimension_numbers = #tpu.dot_dimension_numbers<[1], [0], [0], [1], [0, 0, 1, 1], [], []>} : vector<33x128xf32>, vector<128x128xf32>, vector<33x128xf32> -> vector<33x128xf32>
    %54 = arith.addf %48, %53 : vector<33x128xf32>
    %c0_52 = arith.constant 0 : index
    %c0_53 = arith.constant 0 : index
    %55 = vector.load %arg3[%c0_52, %c0_53] : memref<1x128xf32, #tpu.memory_space<vmem>>, vector<1x128xf32>
    %56 = vector.broadcast %55 : vector<1x128xf32> to vector<33x128xf32>
    %57 = arith.mulf %54, %56 : vector<33x128xf32>
    %c0_54 = arith.constant 0 : index
    %c0_55 = arith.constant 0 : index
    %58 = vector.load %arg4[%c0_54, %c0_55] : memref<1x128xf32, #tpu.memory_space<vmem>>, vector<1x128xf32>
    %59 = vector.broadcast %58 : vector<1x128xf32> to vector<33x128xf32>
    %60 = arith.addf %57, %59 : vector<33x128xf32>
    %c0_56 = arith.constant 0 : index
    %c0_57 = arith.constant 0 : index
    %c0_58 = arith.constant 0 : index
    %61 = vector.load %arg5[%c0_56, %c0_57, %c0_58] : memref<1x33x128xf32, #tpu.memory_space<vmem>>, vector<1x33x128xf32>
    %62 = vector.shape_cast %61 : vector<1x33x128xf32> to vector<33x128xf32>
    %63 = vector.shape_cast %60 : vector<33x128xf32> to vector<1x33x128xf32>
    tpu.vector_store %arg5[%c0_56, %c0_57, %c0_58], %63 {strides = array<i32>} : memref<1x33x128xf32, #tpu.memory_space<vmem>>, vector<1x33x128xf32>,
    return
  }
  func.func @transform_0(%arg0: i32) -> (i32, i32, i32) {
    %c0_i32 = arith.constant 0 : i32
    %c0_i32_0 = arith.constant 0 : i32
    %c0_i32_1 = arith.constant 0 : i32
    return %arg0, %c0_i32, %c0_i32_0 : i32, i32, i32
  }
  func.func @transform_1(%arg0: i32) -> (i32, i32, i32) {
    %c0_i32 = arith.constant 0 : i32
    %c0_i32_0 = arith.constant 0 : i32
    %c0_i32_1 = arith.constant 0 : i32
    %c0_i32_2 = arith.constant 0 : i32
    return %c0_i32, %c0_i32_0, %c0_i32_1 : i32, i32, i32
  }
  func.func @transform_2(%arg0: i32) -> (i32, i32) {
    %c0_i32 = arith.constant 0 : i32
    %c0_i32_0 = arith.constant 0 : i32
    %c0_i32_1 = arith.constant 0 : i32
    return %c0_i32, %c0_i32_0 : i32, i32
  }
  func.func @transform_3(%arg0: i32) -> (i32, i32) {
    %c0_i32 = arith.constant 0 : i32
    %c0_i32_0 = arith.constant 0 : i32
    %c0_i32_1 = arith.constant 0 : i32
    return %c0_i32, %c0_i32_0 : i32, i32
  }
  func.func @transform_4(%arg0: i32) -> (i32, i32, i32) {
    %c0_i32 = arith.constant 0 : i32
    %c0_i32_0 = arith.constant 0 : i32
    %c0_i32_1 = arith.constant 0 : i32
    return %arg0, %c0_i32, %c0_i32_0 : i32, i32, i32
  }
}

</mosaic_0001>

<llo_original>
// kernel: tpu_custom_call.1
$region0: #{tpu_custom_call.1}
  #allocation0 [shape = 'u32[]', space=smem, size = 0x4, offset = 0x4, fixed_abs, tag = 'smem constant byte address 0x4 - core index']
  #allocation1 [shape = 'u32[144,128]{1,0:T(1,128)}', space=vmem, size = 0x12000, scoped, tag = 'internal scratch']
  %s0 = inlined_call_operand.vmem [shape: f32[2,35,384], index: 0, kind: input, shape index: {}]
  %s1 = inlined_call_operand.hbm [shape: f32[9,128,128], index: 1, kind: input, shape index: {}]
  %s2 = inlined_call_operand.vmem [shape: f32[1,128], index: 2, kind: input, shape index: {}]
  %s3 = inlined_call_operand.vmem [shape: f32[1,128], index: 3, kind: input, shape index: {}]
  %s4 = inlined_call_operand.vmem [shape: f32[2,33,128], index: 4, kind: output, shape index: {}]
  %s5 = sld [smem:[#allocation0]]
  $region53: #{tpu_custom_call.1} parent=0
    _
  %s7 = ssub.s32 1, %s5
  %s8 = scalar_select 0, %s7, %s5
  $region1: #{tpu_custom_call.1} parent=0
    #allocation2 [shape = 'u8[589824]{0}', space=vmem, size = 0x90000, scoped, tag = 'input window, operand 1, single buffered']
    #allocation3 [shape = 's32[2]{0}', space=sflag, size = 0x8, scoped, tag = 'scoped memory for tpu_custom_call.1']
    %9 = vsyncpa [#allocation3], 0
    loop: start=0, step=1, limit=4
    $region2: #{tpu_custom_call.1} parent=1 // loop_pre_header
      _
    $region3: #{tpu_custom_call.1} parent=1 // loop_header
      %s11 = sphi 0, %s15
      %p12 = scmp.ge.s32.totalorder %s11, 4
      %s21 = sphi 0, %s23
      %s24 = sphi 0, %s21
      %s25 = sphi 0, %s24
      %s41 = sphi 0, %s25
      %s45 = sphi 0, %s45
      %s47 = sphi 0, %s45
      %s48 = sphi 0, %s47
      %s62 = sphi 0, %s48
      %s66 = sphi 0, %s66
      %s68 = sphi 0, %s66
      %s69 = sphi 0, %s68
      %s83 = sphi 0, %s69
      %s87 = sphi 0, %s87
      %s89 = sphi 0, %s87
      %s90 = sphi 0, %s89
      %s104 = sphi 0, %s90
      %s110 = sphi 0, %s112
      %s113 = sphi 0, %s110
      %s114 = sphi 0, %s113
      %s130 = sphi 0, %s114
    $region4: #{tpu_custom_call.1} parent=1 // loop_header_branch
      %14 = sbr.rel (%p12) target = $region8
    $region5: #{tpu_custom_call.1} parent=1 // loop_body
      %s16 = ssub.s32 %s11, 1
      %s17 = ssub.s32 %s11, 2
      %s18 = sadd.s32 %s11, 1
      %s19 = ssub.s32 %s11, %s18
      %p20 = scmp.eq.s32.totalorder %s19, 0
      %s22 = sadd.s32 %s21, 1
      %s23 = scalar_select %p20, %s21, %s22
      %p26 = pneg %p20
      %p27 = scmp.eq.s32.totalorder %s11, 1
      %p28 = por %p26, %p27
      %p29 = scmp.ne.s32.totalorder %s21, %s24
      %p30 = scmp.eq.s32.totalorder %s11, 0
      %p31 = por %p29, %p30
      %p32 = scmp.ne.s32.totalorder %s21, %s24
      %p33 = scmp.eq.s32.totalorder %s16, 1
      %p34 = por %p32, %p33
      %p35 = scmp.ne.s32.totalorder %s24, %s25
      %p36 = scmp.eq.s32.totalorder %s16, 0
      %p37 = por %p35, %p36
      %p38 = scmp.ne.s32.totalorder %s24, %s25
      %p39 = scmp.eq.s32.totalorder %s17, 1
      %p40 = por %p38, %p39
      %p42 = scmp.ne.s32.totalorder %s25, %s41
      %p43 = scmp.eq.s32.totalorder %s17, 0
      %p44 = por %p42, %p43
      %s46 = sadd.s32 %s45, 1
      %p49 = scmp.eq.s32.totalorder %s11, 1
      %p50 = scmp.ne.s32.totalorder %s45, %s47
      %p51 = scmp.eq.s32.totalorder %s11, 0
      %p52 = por %p50, %p51
      %p53 = scmp.ne.s32.totalorder %s45, %s47
      %p54 = scmp.eq.s32.totalorder %s16, 1
      %p55 = por %p53, %p54
      %p56 = scmp.ne.s32.totalorder %s47, %s48
      %p57 = scmp.eq.s32.totalorder %s16, 0
      %p58 = por %p56, %p57
      %p59 = scmp.ne.s32.totalorder %s47, %s48
      %p60 = scmp.eq.s32.totalorder %s17, 1
      %p61 = por %p59, %p60
      %p63 = scmp.ne.s32.totalorder %s48, %s62
      %p64 = scmp.eq.s32.totalorder %s17, 0
      %p65 = por %p63, %p64
      %s67 = sadd.s32 %s66, 1
      %p70 = scmp.eq.s32.totalorder %s11, 1
      %p71 = scmp.ne.s32.totalorder %s66, %s68
      %p72 = scmp.eq.s32.totalorder %s11, 0
      %p73 = por %p71, %p72
      %p74 = scmp.ne.s32.totalorder %s66, %s68
      %p75 = scmp.eq.s32.totalorder %s16, 1
      %p76 = por %p74, %p75
      %p77 = scmp.ne.s32.totalorder %s68, %s69
      %p78 = scmp.eq.s32.totalorder %s16, 0
      %p79 = por %p77, %p78
      %p80 = scmp.ne.s32.totalorder %s68, %s69
      %p81 = scmp.eq.s32.totalorder %s17, 1
      %p82 = por %p80, %p81
      %p84 = scmp.ne.s32.totalorder %s69, %s83
      %p85 = scmp.eq.s32.totalorder %s17, 0
      %p86 = por %p84, %p85
      %s88 = sadd.s32 %s87, 1
      %p91 = scmp.eq.s32.totalorder %s11, 1
      %p92 = scmp.ne.s32.totalorder %s87, %s89
      %p93 = scmp.eq.s32.totalorder %s11, 0
      %p94 = por %p92, %p93
      %p95 = scmp.ne.s32.totalorder %s87, %s89
      %p96 = scmp.eq.s32.totalorder %s16, 1
      %p97 = por %p95, %p96
      %p98 = scmp.ne.s32.totalorder %s89, %s90
      %p99 = scmp.eq.s32.totalorder %s16, 0
      %p100 = por %p98, %p99
      %p101 = scmp.ne.s32.totalorder %s89, %s90
      %p102 = scmp.eq.s32.totalorder %s17, 1
      %p103 = por %p101, %p102
      %p105 = scmp.ne.s32.totalorder %s90, %s104
      %p106 = scmp.eq.s32.totalorder %s17, 0
      %p107 = por %p105, %p106
      %s108 = ssub.s32 %s11, %s18
      %p109 = scmp.eq.s32.totalorder %s108, 0
      %s111 = sadd.s32 %s110, 1
      %s112 = scalar_select %p109, %s110, %s111
      %p115 = pneg %p109
      %p116 = scmp.eq.s32.totalorder %s11, 1
      %p117 = por %p115, %p116
      %p118 = scmp.ne.s32.totalorder %s110, %s113
      %p119 = scmp.eq.s32.totalorder %s11, 0
      %p120 = por %p118, %p119
      %p121 = scmp.ne.s32.totalorder %s110, %s113
      %p122 = scmp.eq.s32.totalorder %s16, 1
      %p123 = por %p121, %p122
      %p124 = scmp.ne.s32.totalorder %s113, %s114
      %p125 = scmp.eq.s32.totalorder %s16, 0
      %p126 = por %p124, %p125
      %p127 = scmp.ne.s32.totalorder %s113, %s114
      %p128 = scmp.eq.s32.totalorder %s17, 1
      %p129 = por %p127, %p128
      %p131 = scmp.ne.s32.totalorder %s114, %s130
      %p132 = scmp.eq.s32.totalorder %s17, 0
      %p133 = por %p131, %p132
      %p134 = scmp.le.s32.totalorder 1, %s11
      %p135 = scmp.lt.s32.totalorder %s11, 3
      %p136 = pnand %p134, %p135
      %p137 = pneg %p136
      // Predicated region
      $region9: #{tpu_custom_call.1} parent=5 // pred_check
        _
      $region10: #{tpu_custom_call.1} parent=5 // pred_check_branch
        %139 = sbr.rel (%p136) target = $region12
      $region11: #{tpu_custom_call.1} parent=5 // pred_region
        %s140 = ssub.s32 %s11, 1
        // Predicated region
        $region13: #{tpu_custom_call.1} parent=11 // pred_check
          %p141 = pneg %p58
        $region14: #{tpu_custom_call.1} parent=11 // pred_check_branch
          %143 = sbr.rel (%p141) target = $region16
        $region15: #{tpu_custom_call.1} parent=11 // pred_region
          %s145 = ssub.s32 18432, 18432
          %146 = vsyncadd [#allocation3], %s145
          %s147 = sshll.u32 [#allocation2], 4
          %s148 = int_to_ptr.vmem [resolvable:$true] %s147
          %153 = dma.hbm_to_vmem [thread:$0]  %s1, 18432, %s148, [#allocation3], 128, 128, 8
        $region16: #{tpu_custom_call.1} parent=11 // pred_fallthru
          _
        // Predicated region
        $region17: #{tpu_custom_call.1} parent=11 // pred_check
          %p154 = pneg %p79
        $region18: #{tpu_custom_call.1} parent=11 // pred_check_branch
          %156 = sbr.rel (%p154) target = $region20
        $region19: #{tpu_custom_call.1} parent=11 // pred_region
          _
        $region20: #{tpu_custom_call.1} parent=11 // pred_fallthru
          _
        // Predicated region
        $region21: #{tpu_custom_call.1} parent=11 // pred_check
          %p157 = pneg %p100
        $region22: #{tpu_custom_call.1} parent=11 // pred_check_branch
          %159 = sbr.rel (%p157) target = $region24
        $region23: #{tpu_custom_call.1} parent=11 // pred_region
          _
        $region24: #{tpu_custom_call.1} parent=11 // pred_fallthru
          _
      $region12: #{tpu_custom_call.1} parent=5 // pred_fallthru
        _
      %p160 = scmp.lt.s32.totalorder %s11, 2
      // Predicated region
      $region25: #{tpu_custom_call.1} parent=5 // pred_check
        %p161 = pneg %p160
      $region26: #{tpu_custom_call.1} parent=5 // pred_check_branch
        %163 = sbr.rel (%p161) target = $region28
      $region27: #{tpu_custom_call.1} parent=5 // pred_region
        // Predicated region
        $region29: #{tpu_custom_call.1} parent=27 // pred_check
          %p164 = pneg %p31
        $region30: #{tpu_custom_call.1} parent=27 // pred_check_branch
          %166 = sbr.rel (%p164) target = $region32
        $region31: #{tpu_custom_call.1} parent=27 // pred_region
          %p167 = scmp.lt.s32.totalorder %s11, 1
          %s168 = scalar_select %p167, %s11, 1
          %s169 = smul.addr %s168, 15
          %s170 = smul.addr %s169, 8
          %s171 = scalar_lea.vmem %s0, %s170
        $region32: #{tpu_custom_call.1} parent=27 // pred_fallthru
          _
      $region28: #{tpu_custom_call.1} parent=5 // pred_fallthru
        _
      %p172 = scmp.le.s32.totalorder 1, %s11
      %p173 = scmp.lt.s32.totalorder %s11, 3
      %p174 = pnand %p172, %p173
      %p175 = pneg %p174
      // Predicated region
      $region33: #{tpu_custom_call.1} parent=5 // pred_check
        _
      $region34: #{tpu_custom_call.1} parent=5 // pred_check_branch
        %177 = sbr.rel (%p174) target = $region36
      $region35: #{tpu_custom_call.1} parent=5 // pred_region
        %s178 = ssub.s32 %s11, 1
        // Predicated region
        $region37: #{tpu_custom_call.1} parent=35 // pred_check
          %p179 = pneg %p58
        $region38: #{tpu_custom_call.1} parent=35 // pred_check_branch
          %181 = sbr.rel (%p179) target = $region40
        $region39: #{tpu_custom_call.1} parent=35 // pred_region
          %182 = dma.done [#allocation3], 18432
        $region40: #{tpu_custom_call.1} parent=35 // pred_fallthru
          _
        %p183 = scmp.lt.s32.totalorder %s16, 1
        %s184 = scalar_select %p183, %s16, 1
        %s185 = smul.addr %s184, 15
        %s186 = smul.addr %s185, 8
        %s187 = scalar_lea.vmem %s0, %s186
        %p188 = pneg %p37
        %p189 = pneg %p34
        %p190 = pneg %p58
        %p191 = pneg %p55
        %p192 = pneg %p79
        %p193 = pneg %p76
        %p194 = pneg %p100
        %p195 = pneg %p97
        %p196 = pneg %p126
        %p197 = pneg %p123
        %p198 = scmp.lt.s32.totalorder %s16, 1
        %s199 = scalar_select %p198, %s16, 1
        %s200 = smul.addr %s199, 5
        %s201 = smul.addr %s200, 8
        %s202 = scalar_lea.vmem %s4, %s201
        %p203 = scmp.lt.s32.totalorder %s16, 1
        %s204 = scalar_select %p203, %s16, 1
        %s205 = smul.addr %s204, 15
        %s206 = smul.addr %s205, 8
        %s207 = scalar_lea.vmem %s0, %s206
        %p208 = scmp.lt.s32.totalorder %s16, 1
        %s209 = scalar_select %p208, %s16, 1
        %s210 = smul.addr %s209, 5
        %s211 = smul.addr %s210, 8
        %s212 = scalar_lea.vmem %s4, %s211
        %v213 = vld [vmem:[%s207] sm:$0xff]
        %v214 = vld [vmem:[%s207 + $0x18] sm:$0xff]
        %v215 = vld [vmem:[%s207 + $0x30] sm:$0xff]
        %v216 = vld [vmem:[%s207 + $0x48] sm:$0xff]
        %v217 = vld [vmem:[%s207 + $0x60] sm:$0x1]
        %v218 = vld [vmem:[#allocation2] sm:$0xff]
        %v219 = vld [vmem:[#allocation2 + $0x8] sm:$0xff]
        %v220 = vld [vmem:[#allocation2 + $0x10] sm:$0xff]
        %v221 = vld [vmem:[#allocation2 + $0x18] sm:$0xff]
        %v222 = vld [vmem:[#allocation2 + $0x20] sm:$0xff]
        %v223 = vld [vmem:[#allocation2 + $0x28] sm:$0xff]
        %v224 = vld [vmem:[#allocation2 + $0x30] sm:$0xff]
        %v225 = vld [vmem:[#allocation2 + $0x38] sm:$0xff]
        %v226 = vld [vmem:[#allocation2 + $0x40] sm:$0xff]
        %v227 = vld [vmem:[#allocation2 + $0x48] sm:$0xff]
        %v228 = vld [vmem:[#allocation2 + $0x50] sm:$0xff]
        %v229 = vld [vmem:[#allocation2 + $0x58] sm:$0xff]
        %v230 = vld [vmem:[#allocation2 + $0x60] sm:$0xff]
        %v231 = vld [vmem:[#allocation2 + $0x68] sm:$0xff]
        %v232 = vld [vmem:[#allocation2 + $0x70] sm:$0xff]
        %v233 = vld [vmem:[#allocation2 + $0x78] sm:$0xff]
        %v234 = vld [vmem:[%s207 + $0x8] sm:$0xff]
        %v235 = vld [vmem:[%s207 + $0x20] sm:$0xff]
        %v236 = vld [vmem:[%s207 + $0x38] sm:$0xff]
        %v237 = vld [vmem:[%s207 + $0x50] sm:$0xff]
        %v238 = vld [vmem:[%s207 + $0x68] sm:$0x1]
        %s239 = scalar_lea.vmem [#allocation2], 128
        %v240 = vld [vmem:[%s239] sm:$0xff]
        %v241 = vld [vmem:[%s239 + $0x8] sm:$0xff]
        %v242 = vld [vmem:[%s239 + $0x10] sm:$0xff]
        %v243 = vld [vmem:[%s239 + $0x18] sm:$0xff]
        %v244 = vld [vmem:[%s239 + $0x20] sm:$0xff]
        %v245 = vld [vmem:[%s239 + $0x28] sm:$0xff]
        %v246 = vld [vmem:[%s239 + $0x30] sm:$0xff]
        %v247 = vld [vmem:[%s239 + $0x38] sm:$0xff]
        %v248 = vld [vmem:[%s239 + $0x40] sm:$0xff]
        %v249 = vld [vmem:[%s239 + $0x48] sm:$0xff]
        %v250 = vld [vmem:[%s239 + $0x50] sm:$0xff]
        %v251 = vld [vmem:[%s239 + $0x58] sm:$0xff]
        %v252 = vld [vmem:[%s239 + $0x60] sm:$0xff]
        %v253 = vld [vmem:[%s239 + $0x68] sm:$0xff]
        %v254 = vld [vmem:[%s239 + $0x70] sm:$0xff]
        %v255 = vld [vmem:[%s239 + $0x78] sm:$0xff]
        %256 = vmatprep.subr.mxu0 0.0
        %257 = vmatpush1.msra.mxu0 %v240
        %258 = vmatprep.subr.mxu0 0.0
        %259 = vmatpush1.msra.mxu0 %v241
        %260 = vmatprep.subr.mxu0 0.0
        %261 = vmatpush1.msra.mxu0 %v242
        %262 = vmatprep.subr.mxu0 0.0
        %263 = vmatpush1.msra.mxu0 %v243
        %264 = vmatprep.subr.mxu0 0.0
        %265 = vmatpush1.msra.mxu0 %v244
        %266 = vmatprep.subr.mxu0 0.0
        %267 = vmatpush1.msra.mxu0 %v245
        %268 = vmatprep.subr.mxu0 0.0
        %269 = vmatpush1.msra.mxu0 %v246
        %270 = vmatprep.subr.mxu0 0.0
        %271 = vmatpush1.msra.mxu0 %v247
        %272 = vmatprep.subr.mxu0 0.0
        %273 = vmatpush1.msra.mxu0 %v248
        %274 = vmatprep.subr.mxu0 0.0
        %275 = vmatpush1.msra.mxu0 %v249
        %276 = vmatprep.subr.mxu0 0.0
        %277 = vmatpush1.msra.mxu0 %v250
        %278 = vmatprep.subr.mxu0 0.0
        %279 = vmatpush1.msra.mxu0 %v251
        %280 = vmatprep.subr.mxu0 0.0
        %281 = vmatpush1.msra.mxu0 %v252
        %282 = vmatprep.subr.mxu0 0.0
        %283 = vmatpush1.msra.mxu0 %v253
        %284 = vmatprep.subr.mxu0 0.0
        %285 = vmatpush1.msra.mxu0 %v254
        %286 = vmatprep.subr.mxu0 0.0
        %287 = vmatpush1.msra.mxu0 %v255
        %288 = vmatprep.subr.mxu0 0.0
        %289 = vmatpush1.msra.mxu0 0.0
        %290 = vmatprep.subr.mxu0 0.0
        %291 = vmatpush1.msra.mxu0 0.0
        %292 = vmatprep.subr.mxu0 0.0
        %293 = vmatpush1.msra.mxu0 0.0
        %294 = vmatprep.subr.mxu0 0.0
        %295 = vmatpush1.msra.mxu0 0.0
        %296 = vmatprep.subr.mxu0 0.0
        %297 = vmatpush1.msra.mxu0 0.0
        %298 = vmatprep.subr.mxu0 0.0
        %299 = vmatpush1.msra.mxu0 0.0
        %300 = vmatprep.subr.mxu0 0.0
        %301 = vmatpush1.msra.mxu0 0.0
        %302 = vmatprep.subr.mxu0 0.0
        %303 = vmatpush1.msra.mxu0 0.0
        %304 = vmatprep.subr.mxu0 0.0
        %305 = vmatpush1.msra.mxu0 0.0
        %306 = vmatprep.subr.mxu0 0.0
        %307 = vmatpush1.msra.mxu0 0.0
        %308 = vmatprep.subr.mxu0 0.0
        %309 = vmatpush1.msra.mxu0 0.0
        %310 = vmatprep.subr.mxu0 0.0
        %311 = vmatpush1.msra.mxu0 0.0
        %312 = vmatprep.subr.mxu0 0.0
        %313 = vmatpush1.msra.mxu0 0.0
        %314 = vmatprep.subr.mxu0 0.0
        %315 = vmatpush1.msra.mxu0 0.0
        %316 = vmatprep.subr.mxu0 0.0
        %317 = vmatpush1.msra.mxu0 0.0
        %318 = vmatprep.subr.mxu0 0.0
        %319 = vmatpush1.msra.mxu0 0.0
        %320 = vmatprep.mubr.f32.mxu0 0.0
        %321 = vmatmul.mubr.f32.gmra.mrb[0].mxu0 %v234
        %v322 = vpop.f32.mrb[0].mxu0
        %v323 = vadd.f32 0.0, %v322
        %v324 = vpop.f32.mrb[0].mxu0
        %325 = vmatprep.mubr.f32.mxu0 0.0
        %326 = vmatmul.mubr.f32.gmra.mrb[0].mxu0 %v235
        %v327 = vpop.f32.mrb[0].mxu0
        %v328 = vadd.f32 0.0, %v327
        %v329 = vpop.f32.mrb[0].mxu0
        %330 = vmatprep.mubr.f32.mxu0 0.0
        %331 = vmatmul.mubr.f32.gmra.mrb[0].mxu0 %v236
        %v332 = vpop.f32.mrb[0].mxu0
        %v333 = vadd.f32 0.0, %v332
        %v334 = vpop.f32.mrb[0].mxu0
        %335 = vmatprep.mubr.f32.mxu0 0.0
        %336 = vmatmul.mubr.f32.gmra.mrb[0].mxu0 %v237
        %v337 = vpop.f32.mrb[0].mxu0
        %v338 = vadd.f32 0.0, %v337
        %v339 = vpop.f32.mrb[0].mxu0
        %340 = vmatprep.mubr.f32.mxu0 0.0
        %341 = vmatmul.mubr.f32.gmra.mrb[0].mxu0 %v238
        %v342 = vpop.f32.mrb[0].mxu0
        %v343 = vadd.f32 0.0, %v342
        %v344 = vpop.f32.mrb[0].mxu0
        %345 = vdwg.mxu0
        %346 = vmatprep.subr.mxu0 0.0
        %347 = vmatpush1.msra.mxu0 %v218
        %348 = vmatprep.subr.mxu0 0.0
        %349 = vmatpush1.msra.mxu0 %v219
        %350 = vmatprep.subr.mxu0 0.0
        %351 = vmatpush1.msra.mxu0 %v220
        %352 = vmatprep.subr.mxu0 0.0
        %353 = vmatpush1.msra.mxu0 %v221
        %354 = vmatprep.subr.mxu0 0.0
        %355 = vmatpush1.msra.mxu0 %v222
        %356 = vmatprep.subr.mxu0 0.0
        %357 = vmatpush1.msra.mxu0 %v223
        %358 = vmatprep.subr.mxu0 0.0
        %359 = vmatpush1.msra.mxu0 %v224
        %360 = vmatprep.subr.mxu0 0.0
        %361 = vmatpush1.msra.mxu0 %v225
        %362 = vmatprep.subr.mxu0 0.0
        %363 = vmatpush1.msra.mxu0 %v226
        %364 = vmatprep.subr.mxu0 0.0
        %365 = vmatpush1.msra.mxu0 %v227
        %366 = vmatprep.subr.mxu0 0.0
        %367 = vmatpush1.msra.mxu0 %v228
        %368 = vmatprep.subr.mxu0 0.0
        %369 = vmatpush1.msra.mxu0 %v229
        %370 = vmatprep.subr.mxu0 0.0
        %371 = vmatpush1.msra.mxu0 %v230
        %372 = vmatprep.subr.mxu0 0.0
        %373 = vmatpush1.msra.mxu0 %v231
        %374 = vmatprep.subr.mxu0 0.0
        %375 = vmatpush1.msra.mxu0 %v232
        %376 = vmatprep.subr.mxu0 0.0
        %377 = vmatpush1.msra.mxu0 %v233
        %378 = vmatprep.subr.mxu0 0.0
        %379 = vmatpush1.msra.mxu0 0.0
        %380 = vmatprep.subr.mxu0 0.0
        %381 = vmatpush1.msra.mxu0 0.0
        %382 = vmatprep.subr.mxu0 0.0
        %383 = vmatpush1.msra.mxu0 0.0
        %384 = vmatprep.subr.mxu0 0.0
        %385 = vmatpush1.msra.mxu0 0.0
        %386 = vmatprep.subr.mxu0 0.0
        %387 = vmatpush1.msra.mxu0 0.0
        %388 = vmatprep.subr.mxu0 0.0
        %389 = vmatpush1.msra.mxu0 0.0
        %390 = vmatprep.subr.mxu0 0.0
        %391 = vmatpush1.msra.mxu0 0.0
        %392 = vmatprep.subr.mxu0 0.0
        %393 = vmatpush1.msra.mxu0 0.0
        %394 = vmatprep.subr.mxu0 0.0
        %395 = vmatpush1.msra.mxu0 0.0
        %396 = vmatprep.subr.mxu0 0.0
        %397 = vmatpush1.msra.mxu0 0.0
        %398 = vmatprep.subr.mxu0 0.0
        %399 = vmatpush1.msra.mxu0 0.0
        %400 = vmatprep.subr.mxu0 0.0
        %401 = vmatpush1.msra.mxu0 0.0
        %402 = vmatprep.subr.mxu0 0.0
        %403 = vmatpush1.msra.mxu0 0.0
        %404 = vmatprep.subr.mxu0 0.0
        %405 = vmatpush1.msra.mxu0 0.0
        %406 = vmatprep.subr.mxu0 0.0
        %407 = vmatpush1.msra.mxu0 0.0
        %408 = vmatprep.subr.mxu0 0.0
        %409 = vmatpush1.msra.mxu0 0.0
        %410 = vmatprep.mubr.f32.mxu0 0.0
        %411 = vmatmul.mubr.f32.gmra.mrb[0].mxu0 %v213
        %v412 = vpop.f32.mrb[0].mxu0
        %v413 = vadd.f32 %v323, %v412
        %v414 = vpop.f32.mrb[0].mxu0
        %415 = vmatprep.mubr.f32.mxu0 0.0
        %416 = vmatmul.mubr.f32.gmra.mrb[0].mxu0 %v214
        %v417 = vpop.f32.mrb[0].mxu0
        %v418 = vadd.f32 %v328, %v417
        %v419 = vpop.f32.mrb[0].mxu0
        %420 = vmatprep.mubr.f32.mxu0 0.0
        %421 = vmatmul.mubr.f32.gmra.mrb[0].mxu0 %v215
        %v422 = vpop.f32.mrb[0].mxu0
        %v423 = vadd.f32 %v333, %v422
        %v424 = vpop.f32.mrb[0].mxu0
        %425 = vmatprep.mubr.f32.mxu0 0.0
        %426 = vmatmul.mubr.f32.gmra.mrb[0].mxu0 %v216
        %v427 = vpop.f32.mrb[0].mxu0
        %v428 = vadd.f32 %v338, %v427
        %v429 = vpop.f32.mrb[0].mxu0
        %430 = vmatprep.mubr.f32.mxu0 0.0
        %431 = vmatmul.mubr.f32.gmra.mrb[0].mxu0 %v217
        %v432 = vpop.f32.mrb[0].mxu0
        %v433 = vadd.f32 %v343, %v432
        %v434 = vpop.f32.mrb[0].mxu0
        %435 = vdwg.mxu0
        %v436 = vld [vmem:[%s207 + $0x10] sm:$0xff]
        %v437 = vld [vmem:[%s207 + $0x28] sm:$0xff]
        %v438 = vld [vmem:[%s207 + $0x40] sm:$0xff]
        %v439 = vld [vmem:[%s207 + $0x58] sm:$0xff]
        %v440 = vld [vmem:[%s207 + $0x70] sm:$0x1]
        %s441 = scalar_lea.vmem [#allocation2], 256
        %v442 = vld [vmem:[%s441] sm:$0xff]
        %v443 = vld [vmem:[%s441 + $0x8] sm:$0xff]
        %v444 = vld [vmem:[%s441 + $0x10] sm:$0xff]
        %v445 = vld [vmem:[%s441 + $0x18] sm:$0xff]
        %v446 = vld [vmem:[%s441 + $0x20] sm:$0xff]
        %v447 = vld [vmem:[%s441 + $0x28] sm:$0xff]
        %v448 = vld [vmem:[%s441 + $0x30] sm:$0xff]
        %v449 = vld [vmem:[%s441 + $0x38] sm:$0xff]
        %v450 = vld [vmem:[%s441 + $0x40] sm:$0xff]
        %v451 = vld [vmem:[%s441 + $0x48] sm:$0xff]
        %v452 = vld [vmem:[%s441 + $0x50] sm:$0xff]
        %v453 = vld [vmem:[%s441 + $0x58] sm:$0xff]
        %v454 = vld [vmem:[%s441 + $0x60] sm:$0xff]
        %v455 = vld [vmem:[%s441 + $0x68] sm:$0xff]
        %v456 = vld [vmem:[%s441 + $0x70] sm:$0xff]
        %v457 = vld [vmem:[%s441 + $0x78] sm:$0xff]
        %458 = vmatprep.subr.mxu0 0.0
        %459 = vmatpush1.msra.mxu0 %v442
        %460 = vmatprep.subr.mxu0 0.0
        %461 = vmatpush1.msra.mxu0 %v443
        %462 = vmatprep.subr.mxu0 0.0
        %463 = vmatpush1.msra.mxu0 %v444
        %464 = vmatprep.subr.mxu0 0.0
        %465 = vmatpush1.msra.mxu0 %v445
        %466 = vmatprep.subr.mxu0 0.0
        %467 = vmatpush1.msra.mxu0 %v446
        %468 = vmatprep.subr.mxu0 0.0
        %469 = vmatpush1.msra.mxu0 %v447
        %470 = vmatprep.subr.mxu0 0.0
        %471 = vmatpush1.msra.mxu0 %v448
        %472 = vmatprep.subr.mxu0 0.0
        %473 = vmatpush1.msra.mxu0 %v449
        %474 = vmatprep.subr.mxu0 0.0
        %475 = vmatpush1.msra.mxu0 %v450
        %476 = vmatprep.subr.mxu0 0.0
        %477 = vmatpush1.msra.mxu0 %v451
        %478 = vmatprep.subr.mxu0 0.0
        %479 = vmatpush1.msra.mxu0 %v452
        %480 = vmatprep.subr.mxu0 0.0
        %481 = vmatpush1.msra.mxu0 %v453
        %482 = vmatprep.subr.mxu0 0.0
        %483 = vmatpush1.msra.mxu0 %v454
        %484 = vmatprep.subr.mxu0 0.0
        %485 = vmatpush1.msra.mxu0 %v455
        %486 = vmatprep.subr.mxu0 0.0
        %487 = vmatpush1.msra.mxu0 %v456
        %488 = vmatprep.subr.mxu0 0.0
        %489 = vmatpush1.msra.mxu0 %v457
        %490 = vmatprep.subr.mxu0 0.0
        %491 = vmatpush1.msra.mxu0 0.0
        %492 = vmatprep.subr.mxu0 0.0
        %493 = vmatpush1.msra.mxu0 0.0
        %494 = vmatprep.subr.mxu0 0.0
        %495 = vmatpush1.msra.mxu0 0.0
        %496 = vmatprep.subr.mxu0 0.0
        %497 = vmatpush1.msra.mxu0 0.0
        %498 = vmatprep.subr.mxu0 0.0
        %499 = vmatpush1.msra.mxu0 0.0
        %500 = vmatprep.subr.mxu0 0.0
        %501 = vmatpush1.msra.mxu0 0.0
        %502 = vmatprep.subr.mxu0 0.0
        %503 = vmatpush1.msra.mxu0 0.0
        %504 = vmatprep.subr.mxu0 0.0
        %505 = vmatpush1.msra.mxu0 0.0
        %506 = vmatprep.subr.mxu0 0.0
        %507 = vmatpush1.msra.mxu0 0.0
        %508 = vmatprep.subr.mxu0 0.0
        %509 = vmatpush1.msra.mxu0 0.0
        %510 = vmatprep.subr.mxu0 0.0
        %511 = vmatpush1.msra.mxu0 0.0
        %512 = vmatprep.subr.mxu0 0.0
        %513 = vmatpush1.msra.mxu0 0.0
        %514 = vmatprep.subr.mxu0 0.0
        %515 = vmatpush1.msra.mxu0 0.0
        %516 = vmatprep.subr.mxu0 0.0
        %517 = vmatpush1.msra.mxu0 0.0
        %518 = vmatprep.subr.mxu0 0.0
        %519 = vmatpush1.msra.mxu0 0.0
        %520 = vmatprep.subr.mxu0 0.0
        %521 = vmatpush1.msra.mxu0 0.0
        %522 = vmatprep.mubr.f32.mxu0 0.0
        %523 = vmatmul.mubr.f32.gmra.mrb[0].mxu0 %v436
        %v524 = vpop.f32.mrb[0].mxu0
        %v525 = vadd.f32 0.0, %v524
        %v526 = vpop.f32.mrb[0].mxu0
        %527 = vmatprep.mubr.f32.mxu0 0.0
        %528 = vmatmul.mubr.f32.gmra.mrb[0].mxu0 %v437
        %v529 = vpop.f32.mrb[0].mxu0
        %v530 = vadd.f32 0.0, %v529
        %v531 = vpop.f32.mrb[0].mxu0
        %532 = vmatprep.mubr.f32.mxu0 0.0
        %533 = vmatmul.mubr.f32.gmra.mrb[0].mxu0 %v438
        %v534 = vpop.f32.mrb[0].mxu0
        %v535 = vadd.f32 0.0, %v534
        %v536 = vpop.f32.mrb[0].mxu0
        %537 = vmatprep.mubr.f32.mxu0 0.0
        %538 = vmatmul.mubr.f32.gmra.mrb[0].mxu0 %v439
        %v539 = vpop.f32.mrb[0].mxu0
        %v540 = vadd.f32 0.0, %v539
        %v541 = vpop.f32.mrb[0].mxu0
        %542 = vmatprep.mubr.f32.mxu0 0.0
        %543 = vmatmul.mubr.f32.gmra.mrb[0].mxu0 %v440
        %v544 = vpop.f32.mrb[0].mxu0
        %v545 = vadd.f32 0.0, %v544
        %v546 = vpop.f32.mrb[0].mxu0
        %547 = vdwg.mxu0
        %v548 = vadd.f32 %v413, %v525
        %v549 = vadd.f32 %v418, %v530
        %v550 = vadd.f32 %v423, %v535
        %v551 = vadd.f32 %v428, %v540
        %v552 = vadd.f32 %v433, %v545
        %v553 = vld [vmem:[%s207] sm:$0xfe]
        %v554 = vld [vmem:[%s207 + $0x60] sm:$0x3]
        %s555 = scalar_lea.vmem [#allocation2], 384
        %v556 = vld [vmem:[%s555] sm:$0xff]
        %v557 = vld [vmem:[%s555 + $0x8] sm:$0xff]
        %v558 = vld [vmem:[%s555 + $0x10] sm:$0xff]
        %v559 = vld [vmem:[%s555 + $0x18] sm:$0xff]
        %v560 = vld [vmem:[%s555 + $0x20] sm:$0xff]
        %v561 = vld [vmem:[%s555 + $0x28] sm:$0xff]
        %v562 = vld [vmem:[%s555 + $0x30] sm:$0xff]
        %v563 = vld [vmem:[%s555 + $0x38] sm:$0xff]
        %v564 = vld [vmem:[%s555 + $0x40] sm:$0xff]
        %v565 = vld [vmem:[%s555 + $0x48] sm:$0xff]
        %v566 = vld [vmem:[%s555 + $0x50] sm:$0xff]
        %v567 = vld [vmem:[%s555 + $0x58] sm:$0xff]
        %v568 = vld [vmem:[%s555 + $0x60] sm:$0xff]
        %v569 = vld [vmem:[%s555 + $0x68] sm:$0xff]
        %v570 = vld [vmem:[%s555 + $0x70] sm:$0xff]
        %v571 = vld [vmem:[%s555 + $0x78] sm:$0xff]
        %vm577 = vcmask 1046528
        %v578 = vrot.slane %v553, 1
        %v579 = vrot.slane %v214, 1
        %v580 = vsel %vm577, %v578, %v579
        %v581 = vrot.slane %v215, 1
        %v582 = vsel %vm577, %v579, %v581
        %v583 = vrot.slane %v216, 1
        %v584 = vsel %vm577, %v581, %v583
        %v585 = vrot.slane %v554, 1
        %v586 = vsel %vm577, %v583, %v585
        %592 = vmatprep.subr.mxu0 0.0
        %593 = vmatpush1.msra.mxu0 %v556
        %594 = vmatprep.subr.mxu0 0.0
        %595 = vmatpush1.msra.mxu0 %v557
        %596 = vmatprep.subr.mxu0 0.0
        %597 = vmatpush1.msra.mxu0 %v558
        %598 = vmatprep.subr.mxu0 0.0
        %599 = vmatpush1.msra.mxu0 %v559
        %600 = vmatprep.subr.mxu0 0.0
        %601 = vmatpush1.msra.mxu0 %v560
        %602 = vmatprep.subr.mxu0 0.0
        %603 = vmatpush1.msra.mxu0 %v561
        %604 = vmatprep.subr.mxu0 0.0
        %605 = vmatpush1.msra.mxu0 %v562
        %606 = vmatprep.subr.mxu0 0.0
        %607 = vmatpush1.msra.mxu0 %v563
        %608 = vmatprep.subr.mxu0 0.0
        %609 = vmatpush1.msra.mxu0 %v564
        %610 = vmatprep.subr.mxu0 0.0
        %611 = vmatpush1.msra.mxu0 %v565
        %612 = vmatprep.subr.mxu0 0.0
        %613 = vmatpush1.msra.mxu0 %v566
        %614 = vmatprep.subr.mxu0 0.0
        %615 = vmatpush1.msra.mxu0 %v567
        %616 = vmatprep.subr.mxu0 0.0
        %617 = vmatpush1.msra.mxu0 %v568
        %618 = vmatprep.subr.mxu0 0.0
        %619 = vmatpush1.msra.mxu0 %v569
        %620 = vmatprep.subr.mxu0 0.0
        %621 = vmatpush1.msra.mxu0 %v570
        %622 = vmatprep.subr.mxu0 0.0
        %623 = vmatpush1.msra.mxu0 %v571
        %624 = vmatprep.subr.mxu0 0.0
        %625 = vmatpush1.msra.mxu0 0.0
        %626 = vmatprep.subr.mxu0 0.0
        %627 = vmatpush1.msra.mxu0 0.0
        %628 = vmatprep.subr.mxu0 0.0
        %629 = vmatpush1.msra.mxu0 0.0
        %630 = vmatprep.subr.mxu0 0.0
        %631 = vmatpush1.msra.mxu0 0.0
        %632 = vmatprep.subr.mxu0 0.0
        %633 = vmatpush1.msra.mxu0 0.0
        %634 = vmatprep.subr.mxu0 0.0
        %635 = vmatpush1.msra.mxu0 0.0
        %636 = vmatprep.subr.mxu0 0.0
        %637 = vmatpush1.msra.mxu0 0.0
        %638 = vmatprep.subr.mxu0 0.0
        %639 = vmatpush1.msra.mxu0 0.0
        %640 = vmatprep.subr.mxu0 0.0
        %641 = vmatpush1.msra.mxu0 0.0
        %642 = vmatprep.subr.mxu0 0.0
        %643 = vmatpush1.msra.mxu0 0.0
        %644 = vmatprep.subr.mxu0 0.0
        %645 = vmatpush1.msra.mxu0 0.0
        %646 = vmatprep.subr.mxu0 0.0
        %647 = vmatpush1.msra.mxu0 0.0
        %648 = vmatprep.subr.mxu0 0.0
        %649 = vmatpush1.msra.mxu0 0.0
        %650 = vmatprep.subr.mxu0 0.0
        %651 = vmatpush1.msra.mxu0 0.0
        %652 = vmatprep.subr.mxu0 0.0
        %653 = vmatpush1.msra.mxu0 0.0
        %654 = vmatprep.subr.mxu0 0.0
        %655 = vmatpush1.msra.mxu0 0.0
        %656 = vmatprep.mubr.f32.mxu0 0.0
        %657 = vmatmul.mubr.f32.gmra.mrb[0].mxu0 %v580
        %v658 = vpop.f32.mrb[0].mxu0
        %v659 = vadd.f32 0.0, %v658
        %v660 = vpop.f32.mrb[0].mxu0
        %661 = vmatprep.mubr.f32.mxu0 0.0
        %662 = vmatmul.mubr.f32.gmra.mrb[0].mxu0 %v582
        %v663 = vpop.f32.mrb[0].mxu0
        %v664 = vadd.f32 0.0, %v663
        %v665 = vpop.f32.mrb[0].mxu0
        %666 = vmatprep.mubr.f32.mxu0 0.0
        %667 = vmatmul.mubr.f32.gmra.mrb[0].mxu0 %v584
        %v668 = vpop.f32.mrb[0].mxu0
        %v669 = vadd.f32 0.0, %v668
        %v670 = vpop.f32.mrb[0].mxu0
        %671 = vmatprep.mubr.f32.mxu0 0.0
        %672 = vmatmul.mubr.f32.gmra.mrb[0].mxu0 %v586
        %v673 = vpop.f32.mrb[0].mxu0
        %v674 = vadd.f32 0.0, %v673
        %v675 = vpop.f32.mrb[0].mxu0
        %676 = vmatprep.mubr.f32.mxu0 0.0
        %677 = vmatmul.mubr.f32.gmra.mrb[0].mxu0 %v585
        %v678 = vpop.f32.mrb[0].mxu0
        %v679 = vadd.f32 0.0, %v678
        %v680 = vpop.f32.mrb[0].mxu0
        %681 = vdwg.mxu0
        %v682 = vadd.f32 %v548, %v659
        %v683 = vadd.f32 %v549, %v664
        %v684 = vadd.f32 %v550, %v669
        %v685 = vadd.f32 %v551, %v674
        %v686 = vadd.f32 %v552, %v679
        %v687 = vld [vmem:[%s207 + $0x8] sm:$0xfe]
        %v688 = vld [vmem:[%s207 + $0x68] sm:$0x3]
        %s689 = scalar_lea.vmem [#allocation2], 512
        %v690 = vld [vmem:[%s689] sm:$0xff]
        %v691 = vld [vmem:[%s689 + $0x8] sm:$0xff]
        %v692 = vld [vmem:[%s689 + $0x10] sm:$0xff]
        %v693 = vld [vmem:[%s689 + $0x18] sm:$0xff]
        %v694 = vld [vmem:[%s689 + $0x20] sm:$0xff]
        %v695 = vld [vmem:[%s689 + $0x28] sm:$0xff]
        %v696 = vld [vmem:[%s689 + $0x30] sm:$0xff]
        %v697 = vld [vmem:[%s689 + $0x38] sm:$0xff]
        %v698 = vld [vmem:[%s689 + $0x40] sm:$0xff]
        %v699 = vld [vmem:[%s689 + $0x48] sm:$0xff]
        %v700 = vld [vmem:[%s689 + $0x50] sm:$0xff]
        %v701 = vld [vmem:[%s689 + $0x58] sm:$0xff]
        %v702 = vld [vmem:[%s689 + $0x60] sm:$0xff]
        %v703 = vld [vmem:[%s689 + $0x68] sm:$0xff]
        %v704 = vld [vmem:[%s689 + $0x70] sm:$0xff]
        %v705 = vld [vmem:[%s689 + $0x78] sm:$0xff]
        %v711 = vrot.slane %v687, 1
        %v712 = vrot.slane %v235, 1
        %v713 = vsel %vm577, %v711, %v712
        %v714 = vrot.slane %v236, 1
        %v715 = vsel %vm577, %v712, %v714
        %v716 = vrot.slane %v237, 1
        %v717 = vsel %vm577, %v714, %v716
        %v718 = vrot.slane %v688, 1
        %v719 = vsel %vm577, %v716, %v718
        %725 = vmatprep.subr.mxu0 0.0
        %726 = vmatpush1.msra.mxu0 %v690
        %727 = vmatprep.subr.mxu0 0.0
        %728 = vmatpush1.msra.mxu0 %v691
        %729 = vmatprep.subr.mxu0 0.0
        %730 = vmatpush1.msra.mxu0 %v692
        %731 = vmatprep.subr.mxu0 0.0
        %732 = vmatpush1.msra.mxu0 %v693
        %733 = vmatprep.subr.mxu0 0.0
        %734 = vmatpush1.msra.mxu0 %v694
        %735 = vmatprep.subr.mxu0 0.0
        %736 = vmatpush1.msra.mxu0 %v695
        %737 = vmatprep.subr.mxu0 0.0
        %738 = vmatpush1.msra.mxu0 %v696
        %739 = vmatprep.subr.mxu0 0.0
        %740 = vmatpush1.msra.mxu0 %v697
        %741 = vmatprep.subr.mxu0 0.0
        %742 = vmatpush1.msra.mxu0 %v698
        %743 = vmatprep.subr.mxu0 0.0
        %744 = vmatpush1.msra.mxu0 %v699
        %745 = vmatprep.subr.mxu0 0.0
        %746 = vmatpush1.msra.mxu0 %v700
        %747 = vmatprep.subr.mxu0 0.0
        %748 = vmatpush1.msra.mxu0 %v701
        %749 = vmatprep.subr.mxu0 0.0
        %750 = vmatpush1.msra.mxu0 %v702
        %751 = vmatprep.subr.mxu0 0.0
        %752 = vmatpush1.msra.mxu0 %v703
        %753 = vmatprep.subr.mxu0 0.0
        %754 = vmatpush1.msra.mxu0 %v704
        %755 = vmatprep.subr.mxu0 0.0
        %756 = vmatpush1.msra.mxu0 %v705
        %757 = vmatprep.subr.mxu0 0.0
        %758 = vmatpush1.msra.mxu0 0.0
        %759 = vmatprep.subr.mxu0 0.0
        %760 = vmatpush1.msra.mxu0 0.0
        %761 = vmatprep.subr.mxu0 0.0
        %762 = vmatpush1.msra.mxu0 0.0
        %763 = vmatprep.subr.mxu0 0.0
        %764 = vmatpush1.msra.mxu0 0.0
        %765 = vmatprep.subr.mxu0 0.0
        %766 = vmatpush1.msra.mxu0 0.0
        %767 = vmatprep.subr.mxu0 0.0
        %768 = vmatpush1.msra.mxu0 0.0
        %769 = vmatprep.subr.mxu0 0.0
        %770 = vmatpush1.msra.mxu0 0.0
        %771 = vmatprep.subr.mxu0 0.0
        %772 = vmatpush1.msra.mxu0 0.0
        %773 = vmatprep.subr.mxu0 0.0
        %774 = vmatpush1.msra.mxu0 0.0
        %775 = vmatprep.subr.mxu0 0.0
        %776 = vmatpush1.msra.mxu0 0.0
        %777 = vmatprep.subr.mxu0 0.0
        %778 = vmatpush1.msra.mxu0 0.0
        %779 = vmatprep.subr.mxu0 0.0
        %780 = vmatpush1.msra.mxu0 0.0
        %781 = vmatprep.subr.mxu0 0.0
        %782 = vmatpush1.msra.mxu0 0.0
        %783 = vmatprep.subr.mxu0 0.0
        %784 = vmatpush1.msra.mxu0 0.0
        %785 = vmatprep.subr.mxu0 0.0
        %786 = vmatpush1.msra.mxu0 0.0
        %787 = vmatprep.subr.mxu0 0.0
        %788 = vmatpush1.msra.mxu0 0.0
        %789 = vmatprep.mubr.f32.mxu0 0.0
        %790 = vmatmul.mubr.f32.gmra.mrb[0].mxu0 %v713
        %v791 = vpop.f32.mrb[0].mxu0
        %v792 = vadd.f32 0.0, %v791
        %v793 = vpop.f32.mrb[0].mxu0
        %794 = vmatprep.mubr.f32.mxu0 0.0
        %795 = vmatmul.mubr.f32.gmra.mrb[0].mxu0 %v715
        %v796 = vpop.f32.mrb[0].mxu0
        %v797 = vadd.f32 0.0, %v796
        %v798 = vpop.f32.mrb[0].mxu0
        %799 = vmatprep.mubr.f32.mxu0 0.0
        %800 = vmatmul.mubr.f32.gmra.mrb[0].mxu0 %v717
        %v801 = vpop.f32.mrb[0].mxu0
        %v802 = vadd.f32 0.0, %v801
        %v803 = vpop.f32.mrb[0].mxu0
        %804 = vmatprep.mubr.f32.mxu0 0.0
        %805 = vmatmul.mubr.f32.gmra.mrb[0].mxu0 %v719
        %v806 = vpop.f32.mrb[0].mxu0
        %v807 = vadd.f32 0.0, %v806
        %v808 = vpop.f32.mrb[0].mxu0
        %809 = vmatprep.mubr.f32.mxu0 0.0
        %810 = vmatmul.mubr.f32.gmra.mrb[0].mxu0 %v718
        %v811 = vpop.f32.mrb[0].mxu0
        %v812 = vadd.f32 0.0, %v811
        %v813 = vpop.f32.mrb[0].mxu0
        %814 = vdwg.mxu0
        %v815 = vadd.f32 %v682, %v792
        %v816 = vadd.f32 %v683, %v797
        %v817 = vadd.f32 %v684, %v802
        %v818 = vadd.f32 %v685, %v807
        %v819 = vadd.f32 %v686, %v812
        %v820 = vld [vmem:[%s207 + $0x10] sm:$0xfe]
        %v821 = vld [vmem:[%s207 + $0x70] sm:$0x3]
        %s822 = scalar_lea.vmem [#allocation2], 640
        %v823 = vld [vmem:[%s822] sm:$0xff]
        %v824 = vld [vmem:[%s822 + $0x8] sm:$0xff]
        %v825 = vld [vmem:[%s822 + $0x10] sm:$0xff]
        %v826 = vld [vmem:[%s822 + $0x18] sm:$0xff]
        %v827 = vld [vmem:[%s822 + $0x20] sm:$0xff]
        %v828 = vld [vmem:[%s822 + $0x28] sm:$0xff]
        %v829 = vld [vmem:[%s822 + $0x30] sm:$0xff]
        %v830 = vld [vmem:[%s822 + $0x38] sm:$0xff]
        %v831 = vld [vmem:[%s822 + $0x40] sm:$0xff]
        %v832 = vld [vmem:[%s822 + $0x48] sm:$0xff]
        %v833 = vld [vmem:[%s822 + $0x50] sm:$0xff]
        %v834 = vld [vmem:[%s822 + $0x58] sm:$0xff]
        %v835 = vld [vmem:[%s822 + $0x60] sm:$0xff]
        %v836 = vld [vmem:[%s822 + $0x68] sm:$0xff]
        %v837 = vld [vmem:[%s822 + $0x70] sm:$0xff]
        %v838 = vld [vmem:[%s822 + $0x78] sm:$0xff]
        %v844 = vrot.slane %v820, 1
        %v845 = vrot.slane %v437, 1
        %v846 = vsel %vm577, %v844, %v845
        %v847 = vrot.slane %v438, 1
        %v848 = vsel %vm577, %v845, %v847
        %v849 = vrot.slane %v439, 1
        %v850 = vsel %vm577, %v847, %v849
        %v851 = vrot.slane %v821, 1
        %v852 = vsel %vm577, %v849, %v851
        %858 = vmatprep.subr.mxu0 0.0
        %859 = vmatpush1.msra.mxu0 %v823
        %860 = vmatprep.subr.mxu0 0.0
        %861 = vmatpush1.msra.mxu0 %v824
        %862 = vmatprep.subr.mxu0 0.0
        %863 = vmatpush1.msra.mxu0 %v825
        %864 = vmatprep.subr.mxu0 0.0
        %865 = vmatpush1.msra.mxu0 %v826
        %866 = vmatprep.subr.mxu0 0.0
        %867 = vmatpush1.msra.mxu0 %v827
        %868 = vmatprep.subr.mxu0 0.0
        %869 = vmatpush1.msra.mxu0 %v828
        %870 = vmatprep.subr.mxu0 0.0
        %871 = vmatpush1.msra.mxu0 %v829
        %872 = vmatprep.subr.mxu0 0.0
        %873 = vmatpush1.msra.mxu0 %v830
        %874 = vmatprep.subr.mxu0 0.0
        %875 = vmatpush1.msra.mxu0 %v831
        %876 = vmatprep.subr.mxu0 0.0
        %877 = vmatpush1.msra.mxu0 %v832
        %878 = vmatprep.subr.mxu0 0.0
        %879 = vmatpush1.msra.mxu0 %v833
        %880 = vmatprep.subr.mxu0 0.0
        %881 = vmatpush1.msra.mxu0 %v834
        %882 = vmatprep.subr.mxu0 0.0
        %883 = vmatpush1.msra.mxu0 %v835
        %884 = vmatprep.subr.mxu0 0.0
        %885 = vmatpush1.msra.mxu0 %v836
        %886 = vmatprep.subr.mxu0 0.0
        %887 = vmatpush1.msra.mxu0 %v837
        %888 = vmatprep.subr.mxu0 0.0
        %889 = vmatpush1.msra.mxu0 %v838
        %890 = vmatprep.subr.mxu0 0.0
        %891 = vmatpush1.msra.mxu0 0.0
        %892 = vmatprep.subr.mxu0 0.0
        %893 = vmatpush1.msra.mxu0 0.0
        %894 = vmatprep.subr.mxu0 0.0
        %895 = vmatpush1.msra.mxu0 0.0
        %896 = vmatprep.subr.mxu0 0.0
        %897 = vmatpush1.msra.mxu0 0.0
        %898 = vmatprep.subr.mxu0 0.0
        %899 = vmatpush1.msra.mxu0 0.0
        %900 = vmatprep.subr.mxu0 0.0
        %901 = vmatpush1.msra.mxu0 0.0
        %902 = vmatprep.subr.mxu0 0.0
        %903 = vmatpush1.msra.mxu0 0.0
        %904 = vmatprep.subr.mxu0 0.0
        %905 = vmatpush1.msra.mxu0 0.0
        %906 = vmatprep.subr.mxu0 0.0
        %907 = vmatpush1.msra.mxu0 0.0
        %908 = vmatprep.subr.mxu0 0.0
        %909 = vmatpush1.msra.mxu0 0.0
        %910 = vmatprep.subr.mxu0 0.0
        %911 = vmatpush1.msra.mxu0 0.0
        %912 = vmatprep.subr.mxu0 0.0
        %913 = vmatpush1.msra.mxu0 0.0
        %914 = vmatprep.subr.mxu0 0.0
        %915 = vmatpush1.msra.mxu0 0.0
        %916 = vmatprep.subr.mxu0 0.0
        %917 = vmatpush1.msra.mxu0 0.0
        %918 = vmatprep.subr.mxu0 0.0
        %919 = vmatpush1.msra.mxu0 0.0
        %920 = vmatprep.subr.mxu0 0.0
        %921 = vmatpush1.msra.mxu0 0.0
        %922 = vmatprep.mubr.f32.mxu0 0.0
        %923 = vmatmul.mubr.f32.gmra.mrb[0].mxu0 %v846
        %v924 = vpop.f32.mrb[0].mxu0
        %v925 = vadd.f32 0.0, %v924
        %v926 = vpop.f32.mrb[0].mxu0
        %927 = vmatprep.mubr.f32.mxu0 0.0
        %928 = vmatmul.mubr.f32.gmra.mrb[0].mxu0 %v848
        %v929 = vpop.f32.mrb[0].mxu0
        %v930 = vadd.f32 0.0, %v929
        %v931 = vpop.f32.mrb[0].mxu0
        %932 = vmatprep.mubr.f32.mxu0 0.0
        %933 = vmatmul.mubr.f32.gmra.mrb[0].mxu0 %v850
        %v934 = vpop.f32.mrb[0].mxu0
        %v935 = vadd.f32 0.0, %v934
        %v936 = vpop.f32.mrb[0].mxu0
        %937 = vmatprep.mubr.f32.mxu0 0.0
        %938 = vmatmul.mubr.f32.gmra.mrb[0].mxu0 %v852
        %v939 = vpop.f32.mrb[0].mxu0
        %v940 = vadd.f32 0.0, %v939
        %v941 = vpop.f32.mrb[0].mxu0
        %942 = vmatprep.mubr.f32.mxu0 0.0
        %943 = vmatmul.mubr.f32.gmra.mrb[0].mxu0 %v851
        %v944 = vpop.f32.mrb[0].mxu0
        %v945 = vadd.f32 0.0, %v944
        %v946 = vpop.f32.mrb[0].mxu0
        %947 = vdwg.mxu0
        %v948 = vadd.f32 %v815, %v925
        %v949 = vadd.f32 %v816, %v930
        %v950 = vadd.f32 %v817, %v935
        %v951 = vadd.f32 %v818, %v940
        %v952 = vadd.f32 %v819, %v945
        %v953 = vld [vmem:[%s207] sm:$0xfc]
        %v954 = vld [vmem:[%s207 + $0x60] sm:$0x7]
        %s955 = scalar_lea.vmem [#allocation2], 768
        %v956 = vld [vmem:[%s955] sm:$0xff]
        %v957 = vld [vmem:[%s955 + $0x8] sm:$0xff]
        %v958 = vld [vmem:[%s955 + $0x10] sm:$0xff]
        %v959 = vld [vmem:[%s955 + $0x18] sm:$0xff]
        %v960 = vld [vmem:[%s955 + $0x20] sm:$0xff]
        %v961 = vld [vmem:[%s955 + $0x28] sm:$0xff]
        %v962 = vld [vmem:[%s955 + $0x30] sm:$0xff]
        %v963 = vld [vmem:[%s955 + $0x38] sm:$0xff]
        %v964 = vld [vmem:[%s955 + $0x40] sm:$0xff]
        %v965 = vld [vmem:[%s955 + $0x48] sm:$0xff]
        %v966 = vld [vmem:[%s955 + $0x50] sm:$0xff]
        %v967 = vld [vmem:[%s955 + $0x58] sm:$0xff]
        %v968 = vld [vmem:[%s955 + $0x60] sm:$0xff]
        %v969 = vld [vmem:[%s955 + $0x68] sm:$0xff]
        %v970 = vld [vmem:[%s955 + $0x70] sm:$0xff]
        %v971 = vld [vmem:[%s955 + $0x78] sm:$0xff]
        %vm974 = vcmask 1045504
        %v975 = vrot.slane %v953, 2
        %v976 = vrot.slane %v214, 2
        %v977 = vsel %vm974, %v975, %v976
        %v978 = vrot.slane %v215, 2
        %v979 = vsel %vm974, %v976, %v978
        %v980 = vrot.slane %v216, 2
        %v981 = vsel %vm974, %v978, %v980
        %v982 = vrot.slane %v954, 2
        %v983 = vsel %vm974, %v980, %v982
        %989 = vmatprep.subr.mxu0 0.0
        %990 = vmatpush1.msra.mxu0 %v956
        %991 = vmatprep.subr.mxu0 0.0
        %992 = vmatpush1.msra.mxu0 %v957
        %993 = vmatprep.subr.mxu0 0.0
        %994 = vmatpush1.msra.mxu0 %v958
        %995 = vmatprep.subr.mxu0 0.0
        %996 = vmatpush1.msra.mxu0 %v959
        %997 = vmatprep.subr.mxu0 0.0
        %998 = vmatpush1.msra.mxu0 %v960
        %999 = vmatprep.subr.mxu0 0.0
        %1000 = vmatpush1.msra.mxu0 %v961
        %1001 = vmatprep.subr.mxu0 0.0
        %1002 = vmatpush1.msra.mxu0 %v962
        %1003 = vmatprep.subr.mxu0 0.0
        %1004 = vmatpush1.msra.mxu0 %v963
        %1005 = vmatprep.subr.mxu0 0.0
        %1006 = vmatpush1.msra.mxu0 %v964
        %1007 = vmatprep.subr.mxu0 0.0
        %1008 = vmatpush1.msra.mxu0 %v965
        %1009 = vmatprep.subr.mxu0 0.0
        %1010 = vmatpush1.msra.mxu0 %v966
        %1011 = vmatprep.subr.mxu0 0.0
        %1012 = vmatpush1.msra.mxu0 %v967
        %1013 = vmatprep.subr.mxu0 0.0
        %1014 = vmatpush1.msra.mxu0 %v968
        %1015 = vmatprep.subr.mxu0 0.0
        %1016 = vmatpush1.msra.mxu0 %v969
        %1017 = vmatprep.subr.mxu0 0.0
        %1018 = vmatpush1.msra.mxu0 %v970
        %1019 = vmatprep.subr.mxu0 0.0
        %1020 = vmatpush1.msra.mxu0 %v971
        %1021 = vmatprep.subr.mxu0 0.0
        %1022 = vmatpush1.msra.mxu0 0.0
        %1023 = vmatprep.subr.mxu0 0.0
        %1024 = vmatpush1.msra.mxu0 0.0
        %1025 = vmatprep.subr.mxu0 0.0
        %1026 = vmatpush1.msra.mxu0 0.0
        %1027 = vmatprep.subr.mxu0 0.0
        %1028 = vmatpush1.msra.mxu0 0.0
        %1029 = vmatprep.subr.mxu0 0.0
        %1030 = vmatpush1.msra.mxu0 0.0
        %1031 = vmatprep.subr.mxu0 0.0
        %1032 = vmatpush1.msra.mxu0 0.0
        %1033 = vmatprep.subr.mxu0 0.0
        %1034 = vmatpush1.msra.mxu0 0.0
        %1035 = vmatprep.subr.mxu0 0.0
        %1036 = vmatpush1.msra.mxu0 0.0
        %1037 = vmatprep.subr.mxu0 0.0
        %1038 = vmatpush1.msra.mxu0 0.0
        %1039 = vmatprep.subr.mxu0 0.0
        %1040 = vmatpush1.msra.mxu0 0.0
        %1041 = vmatprep.subr.mxu0 0.0
        %1042 = vmatpush1.msra.mxu0 0.0
        %1043 = vmatprep.subr.mxu0 0.0
        %1044 = vmatpush1.msra.mxu0 0.0
        %1045 = vmatprep.subr.mxu0 0.0
        %1046 = vmatpush1.msra.mxu0 0.0
        %1047 = vmatprep.subr.mxu0 0.0
        %1048 = vmatpush1.msra.mxu0 0.0
        %1049 = vmatprep.subr.mxu0 0.0
        %1050 = vmatpush1.msra.mxu0 0.0
        %1051 = vmatprep.subr.mxu0 0.0
        %1052 = vmatpush1.msra.mxu0 0.0
        %1053 = vmatprep.mubr.f32.mxu0 0.0
        %1054 = vmatmul.mubr.f32.gmra.mrb[0].mxu0 %v977
        %v1055 = vpop.f32.mrb[0].mxu0
        %v1056 = vadd.f32 0.0, %v1055
        %v1057 = vpop.f32.mrb[0].mxu0
        %1058 = vmatprep.mubr.f32.mxu0 0.0
        %1059 = vmatmul.mubr.f32.gmra.mrb[0].mxu0 %v979
        %v1060 = vpop.f32.mrb[0].mxu0
        %v1061 = vadd.f32 0.0, %v1060
        %v1062 = vpop.f32.mrb[0].mxu0
        %1063 = vmatprep.mubr.f32.mxu0 0.0
        %1064 = vmatmul.mubr.f32.gmra.mrb[0].mxu0 %v981
        %v1065 = vpop.f32.mrb[0].mxu0
        %v1066 = vadd.f32 0.0, %v1065
        %v1067 = vpop.f32.mrb[0].mxu0
        %1068 = vmatprep.mubr.f32.mxu0 0.0
        %1069 = vmatmul.mubr.f32.gmra.mrb[0].mxu0 %v983
        %v1070 = vpop.f32.mrb[0].mxu0
        %v1071 = vadd.f32 0.0, %v1070
        %v1072 = vpop.f32.mrb[0].mxu0
        %1073 = vmatprep.mubr.f32.mxu0 0.0
        %1074 = vmatmul.mubr.f32.gmra.mrb[0].mxu0 %v982
        %v1075 = vpop.f32.mrb[0].mxu0
        %v1076 = vadd.f32 0.0, %v1075
        %v1077 = vpop.f32.mrb[0].mxu0
        %1078 = vdwg.mxu0
        %v1079 = vadd.f32 %v948, %v1056
        %v1080 = vadd.f32 %v949, %v1061
        %v1081 = vadd.f32 %v950, %v1066
        %v1082 = vadd.f32 %v951, %v1071
        %v1083 = vadd.f32 %v952, %v1076
        %v1084 = vld [vmem:[%s207 + $0x8] sm:$0xfc]
        %v1085 = vld [vmem:[%s207 + $0x68] sm:$0x7]
        %s1086 = scalar_lea.vmem [#allocation2], 896
        %v1087 = vld [vmem:[%s1086] sm:$0xff]
        %v1088 = vld [vmem:[%s1086 + $0x8] sm:$0xff]
        %v1089 = vld [vmem:[%s1086 + $0x10] sm:$0xff]
        %v1090 = vld [vmem:[%s1086 + $0x18] sm:$0xff]
        %v1091 = vld [vmem:[%s1086 + $0x20] sm:$0xff]
        %v1092 = vld [vmem:[%s1086 + $0x28] sm:$0xff]
        %v1093 = vld [vmem:[%s1086 + $0x30] sm:$0xff]
        %v1094 = vld [vmem:[%s1086 + $0x38] sm:$0xff]
        %v1095 = vld [vmem:[%s1086 + $0x40] sm:$0xff]
        %v1096 = vld [vmem:[%s1086 + $0x48] sm:$0xff]
        %v1097 = vld [vmem:[%s1086 + $0x50] sm:$0xff]
        %v1098 = vld [vmem:[%s1086 + $0x58] sm:$0xff]
        %v1099 = vld [vmem:[%s1086 + $0x60] sm:$0xff]
        %v1100 = vld [vmem:[%s1086 + $0x68] sm:$0xff]
        %v1101 = vld [vmem:[%s1086 + $0x70] sm:$0xff]
        %v1102 = vld [vmem:[%s1086 + $0x78] sm:$0xff]
        %v1105 = vrot.slane %v1084, 2
        %v1106 = vrot.slane %v235, 2
        %v1107 = vsel %vm974, %v1105, %v1106
        %v1108 = vrot.slane %v236, 2
        %v1109 = vsel %vm974, %v1106, %v1108
        %v1110 = vrot.slane %v237, 2
        %v1111 = vsel %vm974, %v1108, %v1110
        %v1112 = vrot.slane %v1085, 2
        %v1113 = vsel %vm974, %v1110, %v1112
        %1119 = vmatprep.subr.mxu0 0.0
        %1120 = vmatpush1.msra.mxu0 %v1087
        %1121 = vmatprep.subr.mxu0 0.0
        %1122 = vmatpush1.msra.mxu0 %v1088
        %1123 = vmatprep.subr.mxu0 0.0
        %1124 = vmatpush1.msra.mxu0 %v1089
        %1125 = vmatprep.subr.mxu0 0.0
        %1126 = vmatpush1.msra.mxu0 %v1090
        %1127 = vmatprep.subr.mxu0 0.0
        %1128 = vmatpush1.msra.mxu0 %v1091
        %1129 = vmatprep.subr.mxu0 0.0
        %1130 = vmatpush1.msra.mxu0 %v1092
        %1131 = vmatprep.subr.mxu0 0.0
        %1132 = vmatpush1.msra.mxu0 %v1093
        %1133 = vmatprep.subr.mxu0 0.0
        %1134 = vmatpush1.msra.mxu0 %v1094
        %1135 = vmatprep.subr.mxu0 0.0
        %1136 = vmatpush1.msra.mxu0 %v1095
        %1137 = vmatprep.subr.mxu0 0.0
        %1138 = vmatpush1.msra.mxu0 %v1096
        %1139 = vmatprep.subr.mxu0 0.0
        %1140 = vmatpush1.msra.mxu0 %v1097
        %1141 = vmatprep.subr.mxu0 0.0
        %1142 = vmatpush1.msra.mxu0 %v1098
        %1143 = vmatprep.subr.mxu0 0.0
        %1144 = vmatpush1.msra.mxu0 %v1099
        %1145 = vmatprep.subr.mxu0 0.0
        %1146 = vmatpush1.msra.mxu0 %v1100
        %1147 = vmatprep.subr.mxu0 0.0
        %1148 = vmatpush1.msra.mxu0 %v1101
        %1149 = vmatprep.subr.mxu0 0.0
        %1150 = vmatpush1.msra.mxu0 %v1102
        %1151 = vmatprep.subr.mxu0 0.0
        %1152 = vmatpush1.msra.mxu0 0.0
        %1153 = vmatprep.subr.mxu0 0.0
        %1154 = vmatpush1.msra.mxu0 0.0
        %1155 = vmatprep.subr.mxu0 0.0
        %1156 = vmatpush1.msra.mxu0 0.0
        %1157 = vmatprep.subr.mxu0 0.0
        %1158 = vmatpush1.msra.mxu0 0.0
        %1159 = vmatprep.subr.mxu0 0.0
        %1160 = vmatpush1.msra.mxu0 0.0
        %1161 = vmatprep.subr.mxu0 0.0
        %1162 = vmatpush1.msra.mxu0 0.0
        %1163 = vmatprep.subr.mxu0 0.0
        %1164 = vmatpush1.msra.mxu0 0.0
        %1165 = vmatprep.subr.mxu0 0.0
        %1166 = vmatpush1.msra.mxu0 0.0
        %1167 = vmatprep.subr.mxu0 0.0
        %1168 = vmatpush1.msra.mxu0 0.0
        %1169 = vmatprep.subr.mxu0 0.0
        %1170 = vmatpush1.msra.mxu0 0.0
        %1171 = vmatprep.subr.mxu0 0.0
        %1172 = vmatpush1.msra.mxu0 0.0
        %1173 = vmatprep.subr.mxu0 0.0
        %1174 = vmatpush1.msra.mxu0 0.0
        %1175 = vmatprep.subr.mxu0 0.0
        %1176 = vmatpush1.msra.mxu0 0.0
        %1177 = vmatprep.subr.mxu0 0.0
        %1178 = vmatpush1.msra.mxu0 0.0
        %1179 = vmatprep.subr.mxu0 0.0
        %1180 = vmatpush1.msra.mxu0 0.0
        %1181 = vmatprep.subr.mxu0 0.0
        %1182 = vmatpush1.msra.mxu0 0.0
        %1183 = vmatprep.mubr.f32.mxu0 0.0
        %1184 = vmatmul.mubr.f32.gmra.mrb[0].mxu0 %v1107
        %v1185 = vpop.f32.mrb[0].mxu0
        %v1186 = vadd.f32 0.0, %v1185
        %v1187 = vpop.f32.mrb[0].mxu0
        %1188 = vmatprep.mubr.f32.mxu0 0.0
        %1189 = vmatmul.mubr.f32.gmra.mrb[0].mxu0 %v1109
        %v1190 = vpop.f32.mrb[0].mxu0
        %v1191 = vadd.f32 0.0, %v1190
        %v1192 = vpop.f32.mrb[0].mxu0
        %1193 = vmatprep.mubr.f32.mxu0 0.0
        %1194 = vmatmul.mubr.f32.gmra.mrb[0].mxu0 %v1111
        %v1195 = vpop.f32.mrb[0].mxu0
        %v1196 = vadd.f32 0.0, %v1195
        %v1197 = vpop.f32.mrb[0].mxu0
        %1198 = vmatprep.mubr.f32.mxu0 0.0
        %1199 = vmatmul.mubr.f32.gmra.mrb[0].mxu0 %v1113
        %v1200 = vpop.f32.mrb[0].mxu0
        %v1201 = vadd.f32 0.0, %v1200
        %v1202 = vpop.f32.mrb[0].mxu0
        %1203 = vmatprep.mubr.f32.mxu0 0.0
        %1204 = vmatmul.mubr.f32.gmra.mrb[0].mxu0 %v1112
        %v1205 = vpop.f32.mrb[0].mxu0
        %v1206 = vadd.f32 0.0, %v1205
        %v1207 = vpop.f32.mrb[0].mxu0
        %1208 = vdwg.mxu0
        %v1209 = vadd.f32 %v1079, %v1186
        %v1210 = vadd.f32 %v1080, %v1191
        %v1211 = vadd.f32 %v1081, %v1196
        %v1212 = vadd.f32 %v1082, %v1201
        %v1213 = vadd.f32 %v1083, %v1206
        %v1214 = vld [vmem:[%s207 + $0x10] sm:$0xfc]
        %v1215 = vld [vmem:[%s207 + $0x70] sm:$0x7]
        %s1216 = scalar_lea.vmem [#allocation2], 1024
        %v1217 = vld [vmem:[%s1216] sm:$0xff]
        %v1218 = vld [vmem:[%s1216 + $0x8] sm:$0xff]
        %v1219 = vld [vmem:[%s1216 + $0x10] sm:$0xff]
        %v1220 = vld [vmem:[%s1216 + $0x18] sm:$0xff]
        %v1221 = vld [vmem:[%s1216 + $0x20] sm:$0xff]
        %v1222 = vld [vmem:[%s1216 + $0x28] sm:$0xff]
        %v1223 = vld [vmem:[%s1216 + $0x30] sm:$0xff]
        %v1224 = vld [vmem:[%s1216 + $0x38] sm:$0xff]
        %v1225 = vld [vmem:[%s1216 + $0x40] sm:$0xff]
        %v1226 = vld [vmem:[%s1216 + $0x48] sm:$0xff]
        %v1227 = vld [vmem:[%s1216 + $0x50] sm:$0xff]
        %v1228 = vld [vmem:[%s1216 + $0x58] sm:$0xff]
        %v1229 = vld [vmem:[%s1216 + $0x60] sm:$0xff]
        %v1230 = vld [vmem:[%s1216 + $0x68] sm:$0xff]
        %v1231 = vld [vmem:[%s1216 + $0x70] sm:$0xff]
        %v1232 = vld [vmem:[%s1216 + $0x78] sm:$0xff]
        %v1235 = vrot.slane %v1214, 2
        %v1236 = vrot.slane %v437, 2
        %v1237 = vsel %vm974, %v1235, %v1236
        %v1238 = vrot.slane %v438, 2
        %v1239 = vsel %vm974, %v1236, %v1238
        %v1240 = vrot.slane %v439, 2
        %v1241 = vsel %vm974, %v1238, %v1240
        %v1242 = vrot.slane %v1215, 2
        %v1243 = vsel %vm974, %v1240, %v1242
        %1249 = vmatprep.subr.mxu0 0.0
        %1250 = vmatpush1.msra.mxu0 %v1217
        %1251 = vmatprep.subr.mxu0 0.0
        %1252 = vmatpush1.msra.mxu0 %v1218
        %1253 = vmatprep.subr.mxu0 0.0
        %1254 = vmatpush1.msra.mxu0 %v1219
        %1255 = vmatprep.subr.mxu0 0.0
        %1256 = vmatpush1.msra.mxu0 %v1220
        %1257 = vmatprep.subr.mxu0 0.0
        %1258 = vmatpush1.msra.mxu0 %v1221
        %1259 = vmatprep.subr.mxu0 0.0
        %1260 = vmatpush1.msra.mxu0 %v1222
        %1261 = vmatprep.subr.mxu0 0.0
        %1262 = vmatpush1.msra.mxu0 %v1223
        %1263 = vmatprep.subr.mxu0 0.0
        %1264 = vmatpush1.msra.mxu0 %v1224
        %1265 = vmatprep.subr.mxu0 0.0
        %1266 = vmatpush1.msra.mxu0 %v1225
        %1267 = vmatprep.subr.mxu0 0.0
        %1268 = vmatpush1.msra.mxu0 %v1226
        %1269 = vmatprep.subr.mxu0 0.0
        %1270 = vmatpush1.msra.mxu0 %v1227
        %1271 = vmatprep.subr.mxu0 0.0
        %1272 = vmatpush1.msra.mxu0 %v1228
        %1273 = vmatprep.subr.mxu0 0.0
        %1274 = vmatpush1.msra.mxu0 %v1229
        %1275 = vmatprep.subr.mxu0 0.0
        %1276 = vmatpush1.msra.mxu0 %v1230
        %1277 = vmatprep.subr.mxu0 0.0
        %1278 = vmatpush1.msra.mxu0 %v1231
        %1279 = vmatprep.subr.mxu0 0.0
        %1280 = vmatpush1.msra.mxu0 %v1232
        %1281 = vmatprep.subr.mxu0 0.0
        %1282 = vmatpush1.msra.mxu0 0.0
        %1283 = vmatprep.subr.mxu0 0.0
        %1284 = vmatpush1.msra.mxu0 0.0
        %1285 = vmatprep.subr.mxu0 0.0
        %1286 = vmatpush1.msra.mxu0 0.0
        %1287 = vmatprep.subr.mxu0 0.0
        %1288 = vmatpush1.msra.mxu0 0.0
        %1289 = vmatprep.subr.mxu0 0.0
        %1290 = vmatpush1.msra.mxu0 0.0
        %1291 = vmatprep.subr.mxu0 0.0
        %1292 = vmatpush1.msra.mxu0 0.0
        %1293 = vmatprep.subr.mxu0 0.0
        %1294 = vmatpush1.msra.mxu0 0.0
        %1295 = vmatprep.subr.mxu0 0.0
        %1296 = vmatpush1.msra.mxu0 0.0
        %1297 = vmatprep.subr.mxu0 0.0
        %1298 = vmatpush1.msra.mxu0 0.0
        %1299 = vmatprep.subr.mxu0 0.0
        %1300 = vmatpush1.msra.mxu0 0.0
        %1301 = vmatprep.subr.mxu0 0.0
        %1302 = vmatpush1.msra.mxu0 0.0
        %1303 = vmatprep.subr.mxu0 0.0
        %1304 = vmatpush1.msra.mxu0 0.0
        %1305 = vmatprep.subr.mxu0 0.0
        %1306 = vmatpush1.msra.mxu0 0.0
        %1307 = vmatprep.subr.mxu0 0.0
        %1308 = vmatpush1.msra.mxu0 0.0
        %1309 = vmatprep.subr.mxu0 0.0
        %1310 = vmatpush1.msra.mxu0 0.0
        %1311 = vmatprep.subr.mxu0 0.0
        %1312 = vmatpush1.msra.mxu0 0.0
        %1313 = vmatprep.mubr.f32.mxu0 0.0
        %1314 = vmatmul.mubr.f32.gmra.mrb[0].mxu0 %v1237
        %v1315 = vpop.f32.mrb[0].mxu0
        %v1316 = vadd.f32 0.0, %v1315
        %v1317 = vpop.f32.mrb[0].mxu0
        %1318 = vmatprep.mubr.f32.mxu0 0.0
        %1319 = vmatmul.mubr.f32.gmra.mrb[0].mxu0 %v1239
        %v1320 = vpop.f32.mrb[0].mxu0
        %v1321 = vadd.f32 0.0, %v1320
        %v1322 = vpop.f32.mrb[0].mxu0
        %1323 = vmatprep.mubr.f32.mxu0 0.0
        %1324 = vmatmul.mubr.f32.gmra.mrb[0].mxu0 %v1241
        %v1325 = vpop.f32.mrb[0].mxu0
        %v1326 = vadd.f32 0.0, %v1325
        %v1327 = vpop.f32.mrb[0].mxu0
        %1328 = vmatprep.mubr.f32.mxu0 0.0
        %1329 = vmatmul.mubr.f32.gmra.mrb[0].mxu0 %v1243
        %v1330 = vpop.f32.mrb[0].mxu0
        %v1331 = vadd.f32 0.0, %v1330
        %v1332 = vpop.f32.mrb[0].mxu0
        %1333 = vmatprep.mubr.f32.mxu0 0.0
        %1334 = vmatmul.mubr.f32.gmra.mrb[0].mxu0 %v1242
        %v1335 = vpop.f32.mrb[0].mxu0
        %v1336 = vadd.f32 0.0, %v1335
        %v1337 = vpop.f32.mrb[0].mxu0
        %1338 = vdwg.mxu0
        %v1339 = vadd.f32 %v1209, %v1316
        %v1340 = vadd.f32 %v1210, %v1321
        %v1341 = vadd.f32 %v1211, %v1326
        %v1342 = vadd.f32 %v1212, %v1331
        %v1343 = vadd.f32 %v1213, %v1336
        %v1344 = vld [vmem:[%s2] sm:$0x1]
        %v1346 = vlaneseq
        %v1347 = vshrl.u32 %v1346, 7
        %v1348 = vsub.s32 0, %v1347
        %v1349 = vrot.slane %v1344, %v1348
        %v1351 = vmul.f32 %v1339, %v1349
        %v1352 = vmul.f32 %v1340, %v1349
        %v1353 = vmul.f32 %v1341, %v1349
        %v1354 = vmul.f32 %v1342, %v1349
        %v1355 = vmul.f32 %v1343, %v1349
        %v1356 = vld [vmem:[%s3] sm:$0x1]
        %v1358 = vlaneseq
        %v1359 = vshrl.u32 %v1358, 7
        %v1360 = vsub.s32 0, %v1359
        %v1361 = vrot.slane %v1356, %v1360
        %v1363 = vadd.f32 %v1351, %v1361
        %v1364 = vadd.f32 %v1352, %v1361
        %v1365 = vadd.f32 %v1353, %v1361
        %v1366 = vadd.f32 %v1354, %v1361
        %v1367 = vadd.f32 %v1355, %v1361
        %1368 = vst [vmem:[%s212] sm:$0xff] %v1363
        %1369 = vst [vmem:[%s212 + $0x8] sm:$0xff] %v1364
        %1370 = vst [vmem:[%s212 + $0x10] sm:$0xff] %v1365
        %1371 = vst [vmem:[%s212 + $0x18] sm:$0xff] %v1366
        %1372 = vst [vmem:[%s212 + $0x20] sm:$0x1] %v1367
        %p1373 = scmp.lt.s32.totalorder %s16, 1
        %s1374 = scalar_select %p1373, %s16, 1
        %s1375 = smul.addr %s1374, 5
        %s1376 = smul.addr %s1375, 8
        %s1377 = scalar_lea.vmem %s4, %s1376
        // Predicated region
        $region41: #{tpu_custom_call.1} parent=35 // pred_check
          %p1378 = pneg %p123
        $region42: #{tpu_custom_call.1} parent=35 // pred_check_branch
          %1380 = sbr.rel (%p1378) target = $region44
        $region43: #{tpu_custom_call.1} parent=35 // pred_region
          _
        $region44: #{tpu_custom_call.1} parent=35 // pred_fallthru
          _
      $region36: #{tpu_custom_call.1} parent=5 // pred_fallthru
        _
      %p1381 = scmp.le.s32.totalorder 2, %s11
      // Predicated region
      $region45: #{tpu_custom_call.1} parent=5 // pred_check
        %p1382 = pneg %p1381
      $region46: #{tpu_custom_call.1} parent=5 // pred_check_branch
        %1384 = sbr.rel (%p1382) target = $region48
      $region47: #{tpu_custom_call.1} parent=5 // pred_region
        %s1385 = ssub.s32 %s11, 2
        // Predicated region
        $region49: #{tpu_custom_call.1} parent=47 // pred_check
          %p1386 = pneg %p129
        $region50: #{tpu_custom_call.1} parent=47 // pred_check_branch
          %1388 = sbr.rel (%p1386) target = $region52
        $region51: #{tpu_custom_call.1} parent=47 // pred_region
          %p1389 = scmp.lt.s32.totalorder %s17, 1
          %s1390 = scalar_select %p1389, %s17, 1
          %s1391 = smul.addr %s1390, 5
          %s1392 = smul.addr %s1391, 8
          %s1393 = scalar_lea.vmem %s4, %s1392
        $region52: #{tpu_custom_call.1} parent=47 // pred_fallthru
          _
      $region48: #{tpu_custom_call.1} parent=5 // pred_fallthru
        _
    $region6: #{tpu_custom_call.1} parent=1 // loop_footer
      %s15 = sadd.s32 1, %s11
    $region7: #{tpu_custom_call.1} parent=1 // loop_footer_branch
      %10 = sbr.rel target = $region3
    $region8: #{tpu_custom_call.1} parent=1 // loop_exit
      _
    %1394 = vsyncpa [#allocation3], 1
    %s1395 = scalar_lea.sflag [#allocation3], 1
    %1396 = vsyncpa %s1395, 1

</llo_original>
